<compile_context>
chip_gen: v6e
topology: v6e:2x2x1
jax: 0.10.0
libtpu: 0.0.40
codegen_flags: <defaults>
</compile_context>

<pallas_src>
import functools

import jax
import jax.numpy as jnp
import numpy as np
from jax.experimental import pallas as pl
from jax.experimental.pallas import tpu as pltpu


# ---------------------------------------------------------------------------
# Fused SS_TCN stage kernel
# ---------------------------------------------------------------------------

def _ss_tcn_stage_kernel(dilations, F,
                         x_ref, m_ref, w_in_ref, b_in_ref,
                         w3_ref, b3_ref, w1_ref, b1_ref,
                         wo_ref, bo_ref, o_ref):
    # Per grid step (one batch element):
    #   x_ref : (1, T, Cin) f32      m_ref : (1, T, 1) f32
    #   w_in  : (Cin, F)  bf16       b_in  : (1, F) f32
    #   w3    : (L, F, 3F) bf16      b3    : (L, 1, F) f32   (taps stacked on Cout)
    #   w1    : (L, F, F)  bf16      b1    : (L, 1, F) f32
    #   wo    : (F, Csum)  bf16      bo    : (1, Csum) f32   (task heads concatenated)
    #   o_ref : (1, T, Csum)
    m = m_ref[0]                                              # (T, 1)
    T = x_ref.shape[1]

    # gate_in (1x1 conv) + mask.
    x = x_ref[0].astype(jnp.bfloat16)
    out = jnp.dot(x, w_in_ref[...], preferred_element_type=jnp.float32)
    out = (out + b_in_ref[...]) * m                           # (T, F) f32

    # Stack of DilatedResidualLayers; activation stays resident on-chip.
    for l, d in enumerate(dilations):
        h16 = out.astype(jnp.bfloat16)                        # cast once per layer
        # All 3 taps in one matmul; tap k lives in columns [k*F, (k+1)*F).
        y = jnp.dot(h16, w3_ref[l], preferred_element_type=jnp.float32)   # (T, 3F)
        acc = y[:, F:2 * F]                                   # center tap (no shift)
        if d < T:
            z = jnp.zeros((d, F), jnp.float32)
            # left tap : contribution out[t-d] @ w3[0]  (zero for t < d)
            acc = acc + jnp.concatenate([z, y[:T - d, 0:F]], axis=0)
            # right tap: contribution out[t+d] @ w3[2]  (zero for t >= T-d)
            acc = acc + jnp.concatenate([y[d:, 2 * F:3 * F], z], axis=0)
        h = jnp.maximum(acc + b3_ref[l], 0.0).astype(jnp.bfloat16)        # ReLU
        res = jnp.dot(h, w1_ref[l], preferred_element_type=jnp.float32) + b1_ref[l]
        # TODO(synk): nn.Dropout treated as identity (eval-mode semantics only).
        out = (out + res) * m                                 # residual + mask

    # Concatenated task heads (1x1 convs) + mask, one lane-denser store.
    heads = jnp.dot(out.astype(jnp.bfloat16), wo_ref[...],
                    preferred_element_type=jnp.float32) + bo_ref[...]
    o_ref[0] = (heads * m).astype(o_ref.dtype)


def ss_tcn_stage(x_ntc, mask_nt1, sp, dilations):
    """One fused SS_TCN stage: gate_in -> L dilated residual layers -> all heads."""
    N, T, Cin = x_ntc.shape
    F = sp["w_in"].shape[1]
    L = len(dilations)
    Csum = sp["wo"].shape[1]
    kernel = functools.partial(_ss_tcn_stage_kernel, tuple(dilations), F)
    # TODO(synk): for very long sequences add a second "parallel" grid axis tiling T
    # with a +/- receptive-field halo so whole-T blocks never exceed v7x's 64 MiB VMEM.
    return pl.pallas_call(
        kernel,
        out_shape=jax.ShapeDtypeStruct((N, T, Csum), x_ntc.dtype),
        grid_spec=pltpu.PrefetchScalarGridSpec(
            num_scalar_prefetch=0,
            grid=(N,),
            in_specs=[
                pl.BlockSpec((1, T, Cin), lambda n: (n, 0, 0)),     # x
                pl.BlockSpec((1, T, 1), lambda n: (n, 0, 0)),       # mask (N,T,1)
                pl.BlockSpec((Cin, F), lambda n: (0, 0)),           # w_in  (bf16)
                pl.BlockSpec((1, F), lambda n: (0, 0)),             # b_in
                pl.BlockSpec((L, F, 3 * F), lambda n: (0, 0, 0)),   # w3 stacked (bf16)
                pl.BlockSpec((L, 1, F), lambda n: (0, 0, 0)),       # b3
                pl.BlockSpec((L, F, F), lambda n: (0, 0, 0)),       # w1 stacked (bf16)
                pl.BlockSpec((L, 1, F), lambda n: (0, 0, 0)),       # b1
                pl.BlockSpec((F, Csum), lambda n: (0, 0)),          # w_out concat (bf16)
                pl.BlockSpec((1, Csum), lambda n: (0, 0)),          # b_out concat
            ],
            out_specs=pl.BlockSpec((1, T, Csum), lambda n: (n, 0, 0)),
        ),
        compiler_params=pltpu.CompilerParams(
            dimension_semantics=("parallel",),
            vmem_limit_bytes=64 * 1024 * 1024),   # v5e default (16 MiB) is too small
    )(x_ntc, mask_nt1, sp["w_in"], sp["b_in"],
      sp["w3"], sp["b3"], sp["w1"], sp["b1"], sp["wo"], sp["bo"])


# ---------------------------------------------------------------------------
# Parameter packing (done once, outside jit)
# ---------------------------------------------------------------------------

def pack_params(params):
    """Stack per-layer weights and pre-cast MXU operands to bf16, once."""
    packed = []
    for sp in params["stages"]:
        w3 = jnp.stack([lp["w3"] for lp in sp["layers"]])             # (L, 3, F, F)
        L, _, F, _ = w3.shape
        packed.append(dict(
            w_in=sp["w_in"].astype(jnp.bfloat16),
            b_in=sp["b_in"],
            # taps stacked along the output dim: columns k*F:(k+1)*F == tap k
            w3=jnp.transpose(w3, (0, 2, 1, 3)).reshape(L, F, 3 * F)
               .astype(jnp.bfloat16),
            b3=jnp.stack([lp["b3"] for lp in sp["layers"]]),           # (L, 1, F)
            w1=jnp.stack([lp["w1"] for lp in sp["layers"]]).astype(jnp.bfloat16),
            b1=jnp.stack([lp["b1"] for lp in sp["layers"]]),           # (L, 1, F)
            wo=jnp.concatenate(sp["w_out"], axis=1).astype(jnp.bfloat16),
            bo=jnp.concatenate(sp["b_out"], axis=1),
        ))
    return {"stages": packed}


# ---------------------------------------------------------------------------
# MS_TCN driver (Pallas path)
# ---------------------------------------------------------------------------

def ms_tcn_forward(x_nct, mask_n1t, packed, dilations, num_classes):
    # Single layout change: PyTorch NCT -> NTC (channels on lanes).
    x_ntc = jnp.transpose(x_nct, (0, 2, 1))
    m_nt1 = jnp.transpose(mask_n1t, (0, 2, 1))                # (N, T, 1)
    offs = np.concatenate([[0], np.cumsum(num_classes)]).astype(int)

    def split_tasks(h):
        return [h[..., offs[i]:offs[i + 1]] for i in range(len(num_classes))]

    # The head kernel already applies the (binary) mask, so PyTorch's extra
    # post-stage `* mask` is a no-op and is dropped (perf-review item).
    heads = ss_tcn_stage(x_ntc, m_nt1, packed["stages"][0], dilations)
    outputs = [[o] for o in split_tasks(heads)]
    for sp in packed["stages"][1:]:
        # Inter-stage glue (per-task channel softmax + concat) left to XLA.
        prev = split_tasks(heads)
        xin = jnp.concatenate(
            [jax.nn.softmax(o, axis=-1) * m_nt1 for o in prev], axis=-1)
        heads = ss_tcn_stage(xin, m_nt1, sp, dilations)
        for i, o in enumerate(split_tasks(heads)):
            outputs[i].append(o)
    # Per task: (num_stages, N, num_classes_i, T), back in PyTorch NCT layout.
    return [jnp.stack([jnp.transpose(o, (0, 2, 1)) for o in outs], axis=0)
            for outs in outputs]


# ---------------------------------------------------------------------------
# Pure-JAX reference (faithful to the PyTorch module structure)
# ---------------------------------------------------------------------------

def _ref_pointwise(x, w, b):
    return jnp.einsum("ntc,cd->ntd", x.astype(jnp.bfloat16), w.astype(jnp.bfloat16),
                      preferred_element_type=jnp.float32) + b


def _ref_dilated(x, m, w3, b3, w1, b1, d):
    T = x.shape[1]
    xp = jnp.pad(x, ((0, 0), (d, d), (0, 0))).astype(jnp.bfloat16)
    w3b = w3.astype(jnp.bfloat16)
    acc = b3
    for k in range(3):
        acc = acc + jnp.einsum("ntc,cd->ntd", xp[:, k * d:k * d + T, :], w3b[k],
                               preferred_element_type=jnp.float32)
    h = jnp.maximum(acc, 0.0)
    y = _ref_pointwise(h, w1, b1)
    return (x + y) * m


def _ref_ss_tcn(x, m, sp, dilations):
    out = _ref_pointwise(x, sp["w_in"], sp["b_in"]) * m
    for d, lp in zip(dilations, sp["layers"]):
        out = _ref_dilated(out, m, lp["w3"], lp["b3"], lp["w1"], lp["b1"], d)
    return [_ref_pointwise(out, w, b) * m
            for w, b in zip(sp["w_out"], sp["b_out"])]


def ms_tcn_reference(x_nct, mask_n1t, params, dilations):
    x = jnp.transpose(x_nct, (0, 2, 1))
    m = jnp.transpose(mask_n1t, (0, 2, 1))
    out = [o * m for o in _ref_ss_tcn(x, m, params["stages"][0], dilations)]
    outputs = [[o] for o in out]
    for sp in params["stages"][1:]:
        xin = jnp.concatenate([jax.nn.softmax(o, axis=-1) * m for o in out], axis=-1)
        out = [o * m for o in _ref_ss_tcn(xin, m, sp, dilations)]
        outputs = [outputs[i] + [o] for i, o in enumerate(out)]
    return [jnp.stack([jnp.transpose(o, (0, 2, 1)) for o in outs], axis=0)
            for outs in outputs]


# ---------------------------------------------------------------------------
# Test harness
# ---------------------------------------------------------------------------

def _make_params(key, num_stages, num_layers, num_f_maps, dim, num_classes):
    keys = iter(jax.random.split(key, 256))

    def u(shape, fan_in):
        bound = 1.0 / np.sqrt(fan_in)
        return jax.random.uniform(next(keys), shape, jnp.float32, -bound, bound)

    F = num_f_maps
    stages = []
    in_dim = dim
    for s in range(num_stages):
        if s != 0:
            in_dim = sum(num_classes)
        stages.append(dict(
            w_in=u((in_dim, F), in_dim), b_in=u((1, F), in_dim),
            layers=[dict(w3=u((3, F, F), 3 * F), b3=u((1, F), 3 * F),
                         w1=u((F, F), F), b1=u((1, F), F))
                    for _ in range(num_layers)],
            w_out=[u((F, nc), F) for nc in num_classes],
            b_out=[u((1, nc), F) for nc in num_classes],
        ))
    return {"stages": stages}


if __name__ == "__main__":
    # Small MS_TCN config: 2 stages, 3 layers (dilations 1, 2, 4), 2 task heads.
    num_stages, num_layers, num_f_maps = 2, 3, 16
    dim, num_classes = 8, [6, 4]
    N, T = 2, 32
    dilations = [2 ** i for i in range(num_layers)]

    key = jax.random.PRNGKey(0)
    kp, kx, km = jax.random.split(key, 3)
    params = _make_params(kp, num_stages, num_layers, num_f_maps, dim, num_classes)
    packed = pack_params(params)          # bf16 pre-cast + stacking, once, outside jit

    x = jax.random.normal(kx, (N, dim, T), jnp.float32)
    mask = (jax.random.uniform(km, (N, 1, T)) > 0.2).astype(jnp.float32)

    fwd = jax.jit(lambda xx, mm: ms_tcn_forward(xx, mm, packed, dilations, num_classes))
    outs = jax.block_until_ready(fwd(x, mask))

    refs = ms_tcn_reference(x, mask, params, dilations)
    for o, r in zip(outs, refs):
        np.testing.assert_allclose(np.asarray(o), np.asarray(r),
                                   rtol=1e-3, atol=1e-3)
    print("KERNEL_OK")
</pallas_src>

<mosaic_0001>
module attributes {stable_mosaic.version = 11 : i64} {
  func.func @_ss_tcn_stage_kernel(%arg0: i32, %arg1: memref<1x32x8xf32, #tpu.memory_space<vmem>>, %arg2: memref<1x32x1xf32, #tpu.memory_space<vmem>>, %arg3: memref<8x16xbf16, #tpu.memory_space<vmem>>, %arg4: memref<1x16xf32, #tpu.memory_space<vmem>>, %arg5: memref<3x16x48xbf16, #tpu.memory_space<vmem>>, %arg6: memref<3x1x16xf32, #tpu.memory_space<vmem>>, %arg7: memref<3x16x16xbf16, #tpu.memory_space<vmem>>, %arg8: memref<3x1x16xf32, #tpu.memory_space<vmem>>, %arg9: memref<16x10xbf16, #tpu.memory_space<vmem>>, %arg10: memref<1x10xf32, #tpu.memory_space<vmem>>, %arg11: memref<1x32x10xf32, #tpu.memory_space<vmem>>) attributes {dimension_semantics = [#tpu.dimension_semantics<parallel>], iteration_bounds = array<i64: 2>, scalar_prefetch = 0 : i64, scratch_operands = 0 : i64, tpu.core_type = #tpu.core_type<tc>, window_params = [{transform_indices = @transform_0, window_bounds = array<i64: 1, 32, 8>}, {transform_indices = @transform_1, window_bounds = array<i64: 1, 32, 1>}, {pipeline_mode = #tpu.pipeline_mode<synchronous>, transform_indices = @transform_2, window_bounds = array<i64: 8, 16>}, {pipeline_mode = #tpu.pipeline_mode<synchronous>, transform_indices = @transform_3, window_bounds = array<i64: 1, 16>}, {pipeline_mode = #tpu.pipeline_mode<synchronous>, transform_indices = @transform_4, window_bounds = array<i64: 3, 16, 48>}, {pipeline_mode = #tpu.pipeline_mode<synchronous>, transform_indices = @transform_5, window_bounds = array<i64: 3, 1, 16>}, {pipeline_mode = #tpu.pipeline_mode<synchronous>, transform_indices = @transform_6, window_bounds = array<i64: 3, 16, 16>}, {pipeline_mode = #tpu.pipeline_mode<synchronous>, transform_indices = @transform_7, window_bounds = array<i64: 3, 1, 16>}, {pipeline_mode = #tpu.pipeline_mode<synchronous>, transform_indices = @transform_8, window_bounds = array<i64: 16, 10>}, {pipeline_mode = #tpu.pipeline_mode<synchronous>, transform_indices = @transform_9, window_bounds = array<i64: 1, 10>}, {transform_indices = @transform_10, window_bounds = array<i64: 1, 32, 10>}]} {
    %c0 = arith.constant 0 : index
    %c0_0 = arith.constant 0 : index
    %c0_1 = arith.constant 0 : index
    %0 = vector.load %arg2[%c0, %c0_0, %c0_1] : memref<1x32x1xf32, #tpu.memory_space<vmem>>, vector<1x32x1xf32>
    %1 = vector.shape_cast %0 : vector<1x32x1xf32> to vector<32x1xf32>
    %c0_2 = arith.constant 0 : index
    %c0_3 = arith.constant 0 : index
    %c0_4 = arith.constant 0 : index
    %2 = vector.load %arg1[%c0_2, %c0_3, %c0_4] : memref<1x32x8xf32, #tpu.memory_space<vmem>>, vector<1x32x8xf32>
    %3 = vector.shape_cast %2 : vector<1x32x8xf32> to vector<32x8xf32>
    %4 = arith.truncf %3 : vector<32x8xf32> to vector<32x8xbf16>
    %c0_5 = arith.constant 0 : index
    %c0_6 = arith.constant 0 : index
    %5 = vector.load %arg3[%c0_5, %c0_6] : memref<8x16xbf16, #tpu.memory_space<vmem>>, vector<8x16xbf16>
    %cst = arith.constant dense<0.000000e+00> : vector<32x16xf32>
    %6 = tpu.matmul %4, %5, %cst {dimension_numbers = #tpu.dot_dimension_numbers<[1], [0], [0], [1], [0, 0, 1, 1], [], []>} : vector<32x8xbf16>, vector<8x16xbf16>, vector<32x16xf32> -> vector<32x16xf32>
    %c0_7 = arith.constant 0 : index
    %c0_8 = arith.constant 0 : index
    %7 = vector.load %arg4[%c0_7, %c0_8] : memref<1x16xf32, #tpu.memory_space<vmem>>, vector<1x16xf32>
    %8 = vector.broadcast %7 : vector<1x16xf32> to vector<32x16xf32>
    %9 = arith.addf %6, %8 : vector<32x16xf32>
    %10 = vector.broadcast %1 : vector<32x1xf32> to vector<32x16xf32>
    %11 = arith.mulf %9, %10 : vector<32x16xf32>
    %12 = arith.truncf %11 : vector<32x16xf32> to vector<32x16xbf16>
    %c0_9 = arith.constant 0 : index
    %c0_10 = arith.constant 0 : index
    %c0_11 = arith.constant 0 : index
    %13 = vector.load %arg5[%c0_9, %c0_10, %c0_11] : memref<3x16x48xbf16, #tpu.memory_space<vmem>>, vector<1x16x48xbf16>
    %14 = vector.shape_cast %13 : vector<1x16x48xbf16> to vector<16x48xbf16>
    %cst_12 = arith.constant dense<0.000000e+00> : vector<32x48xf32>
    %15 = tpu.matmul %12, %14, %cst_12 {dimension_numbers = #tpu.dot_dimension_numbers<[1], [0], [0], [1], [0, 0, 1, 1], [], []>} : vector<32x16xbf16>, vector<16x48xbf16>, vector<32x48xf32> -> vector<32x48xf32>
    %16 = vector.extract_strided_slice %15 {offsets = [0, 16], sizes = [32, 16], strides = [1, 1]} : vector<32x48xf32> to vector<32x16xf32>
    %cst_13 = arith.constant 0.000000e+00 : f32
    %17 = vector.broadcast %cst_13 : f32 to vector<1x16xf32>
    %18 = vector.extract_strided_slice %15 {offsets = [0, 0], sizes = [31, 16], strides = [1, 1]} : vector<32x48xf32> to vector<31x16xf32>
    %19 = tpu.concatenate %17, %18 in 0 : vector<1x16xf32>, vector<31x16xf32> -> vector<32x16xf32>
    %20 = arith.addf %16, %19 : vector<32x16xf32>
    %21 = vector.extract_strided_slice %15 {offsets = [1, 32], sizes = [31, 16], strides = [1, 1]} : vector<32x48xf32> to vector<31x16xf32>
    %22 = tpu.concatenate %21, %17 in 0 : vector<31x16xf32>, vector<1x16xf32> -> vector<32x16xf32>
    %23 = arith.addf %20, %22 : vector<32x16xf32>
    %c0_14 = arith.constant 0 : index
    %c0_15 = arith.constant 0 : index
    %c0_16 = arith.constant 0 : index
    %24 = vector.load %arg6[%c0_14, %c0_15, %c0_16] : memref<3x1x16xf32, #tpu.memory_space<vmem>>, vector<1x1x16xf32>
    %25 = vector.shape_cast %24 : vector<1x1x16xf32> to vector<1x16xf32>
    %26 = vector.broadcast %25 : vector<1x16xf32> to vector<32x16xf32>
    %27 = arith.addf %23, %26 : vector<32x16xf32>
    %cst_17 = arith.constant 0.000000e+00 : f32
    %28 = vector.broadcast %cst_17 : f32 to vector<32x16xf32>
    %29 = arith.maximumf %27, %28 : vector<32x16xf32>
    %30 = arith.truncf %29 : vector<32x16xf32> to vector<32x16xbf16>
    %c0_18 = arith.constant 0 : index
    %c0_19 = arith.constant 0 : index
    %c0_20 = arith.constant 0 : index
    %31 = vector.load %arg7[%c0_18, %c0_19, %c0_20] : memref<3x16x16xbf16, #tpu.memory_space<vmem>>, vector<1x16x16xbf16>
    %32 = vector.shape_cast %31 : vector<1x16x16xbf16> to vector<16x16xbf16>
    %cst_21 = arith.constant dense<0.000000e+00> : vector<32x16xf32>
    %33 = tpu.matmul %30, %32, %cst_21 {dimension_numbers = #tpu.dot_dimension_numbers<[1], [0], [0], [1], [0, 0, 1, 1], [], []>} : vector<32x16xbf16>, vector<16x16xbf16>, vector<32x16xf32> -> vector<32x16xf32>
    %c0_22 = arith.constant 0 : index
    %c0_23 = arith.constant 0 : index
    %c0_24 = arith.constant 0 : index
    %34 = vector.load %arg8[%c0_22, %c0_23, %c0_24] : memref<3x1x16xf32, #tpu.memory_space<vmem>>, vector<1x1x16xf32>
    %35 = vector.shape_cast %34 : vector<1x1x16xf32> to vector<1x16xf32>
    %36 = vector.broadcast %35 : vector<1x16xf32> to vector<32x16xf32>
    %37 = arith.addf %33, %36 : vector<32x16xf32>
    %38 = arith.addf %11, %37 : vector<32x16xf32>
    %39 = vector.broadcast %1 : vector<32x1xf32> to vector<32x16xf32>
    %40 = arith.mulf %38, %39 : vector<32x16xf32>
    %41 = arith.truncf %40 : vector<32x16xf32> to vector<32x16xbf16>
    %c1 = arith.constant 1 : index
    %c0_25 = arith.constant 0 : index
    %c0_26 = arith.constant 0 : index
    %42 = vector.load %arg5[%c1, %c0_25, %c0_26] : memref<3x16x48xbf16, #tpu.memory_space<vmem>>, vector<1x16x48xbf16>
    %43 = vector.shape_cast %42 : vector<1x16x48xbf16> to vector<16x48xbf16>
    %cst_27 = arith.constant dense<0.000000e+00> : vector<32x48xf32>
    %44 = tpu.matmul %41, %43, %cst_27 {dimension_numbers = #tpu.dot_dimension_numbers<[1], [0], [0], [1], [0, 0, 1, 1], [], []>} : vector<32x16xbf16>, vector<16x48xbf16>, vector<32x48xf32> -> vector<32x48xf32>
    %45 = vector.extract_strided_slice %44 {offsets = [0, 16], sizes = [32, 16], strides = [1, 1]} : vector<32x48xf32> to vector<32x16xf32>
    %cst_28 = arith.constant 0.000000e+00 : f32
    %46 = vector.broadcast %cst_28 : f32 to vector<2x16xf32>
    %47 = vector.extract_strided_slice %44 {offsets = [0, 0], sizes = [30, 16], strides = [1, 1]} : vector<32x48xf32> to vector<30x16xf32>
    %48 = tpu.concatenate %46, %47 in 0 : vector<2x16xf32>, vector<30x16xf32> -> vector<32x16xf32>
    %49 = arith.addf %45, %48 : vector<32x16xf32>
    %50 = vector.extract_strided_slice %44 {offsets = [2, 32], sizes = [30, 16], strides = [1, 1]} : vector<32x48xf32> to vector<30x16xf32>
    %51 = tpu.concatenate %50, %46 in 0 : vector<30x16xf32>, vector<2x16xf32> -> vector<32x16xf32>
    %52 = arith.addf %49, %51 : vector<32x16xf32>
    %c1_29 = arith.constant 1 : index
    %c0_30 = arith.constant 0 : index
    %c0_31 = arith.constant 0 : index
    %53 = vector.load %arg6[%c1_29, %c0_30, %c0_31] : memref<3x1x16xf32, #tpu.memory_space<vmem>>, vector<1x1x16xf32>
    %54 = vector.shape_cast %53 : vector<1x1x16xf32> to vector<1x16xf32>
    %55 = vector.broadcast %54 : vector<1x16xf32> to vector<32x16xf32>
    %56 = arith.addf %52, %55 : vector<32x16xf32>
    %cst_32 = arith.constant 0.000000e+00 : f32
    %57 = vector.broadcast %cst_32 : f32 to vector<32x16xf32>
    %58 = arith.maximumf %56, %57 : vector<32x16xf32>
    %59 = arith.truncf %58 : vector<32x16xf32> to vector<32x16xbf16>
    %c1_33 = arith.constant 1 : index
    %c0_34 = arith.constant 0 : index
    %c0_35 = arith.constant 0 : index
    %60 = vector.load %arg7[%c1_33, %c0_34, %c0_35] : memref<3x16x16xbf16, #tpu.memory_space<vmem>>, vector<1x16x16xbf16>
    %61 = vector.shape_cast %60 : vector<1x16x16xbf16> to vector<16x16xbf16>
    %cst_36 = arith.constant dense<0.000000e+00> : vector<32x16xf32>
    %62 = tpu.matmul %59, %61, %cst_36 {dimension_numbers = #tpu.dot_dimension_numbers<[1], [0], [0], [1], [0, 0, 1, 1], [], []>} : vector<32x16xbf16>, vector<16x16xbf16>, vector<32x16xf32> -> vector<32x16xf32>
    %c1_37 = arith.constant 1 : index
    %c0_38 = arith.constant 0 : index
    %c0_39 = arith.constant 0 : index
    %63 = vector.load %arg8[%c1_37, %c0_38, %c0_39] : memref<3x1x16xf32, #tpu.memory_space<vmem>>, vector<1x1x16xf32>
    %64 = vector.shape_cast %63 : vector<1x1x16xf32> to vector<1x16xf32>
    %65 = vector.broadcast %64 : vector<1x16xf32> to vector<32x16xf32>
    %66 = arith.addf %62, %65 : vector<32x16xf32>
    %67 = arith.addf %40, %66 : vector<32x16xf32>
    %68 = vector.broadcast %1 : vector<32x1xf32> to vector<32x16xf32>
    %69 = arith.mulf %67, %68 : vector<32x16xf32>
    %70 = arith.truncf %69 : vector<32x16xf32> to vector<32x16xbf16>
    %c2 = arith.constant 2 : index
    %c0_40 = arith.constant 0 : index
    %c0_41 = arith.constant 0 : index
    %71 = vector.load %arg5[%c2, %c0_40, %c0_41] : memref<3x16x48xbf16, #tpu.memory_space<vmem>>, vector<1x16x48xbf16>
    %72 = vector.shape_cast %71 : vector<1x16x48xbf16> to vector<16x48xbf16>
    %cst_42 = arith.constant dense<0.000000e+00> : vector<32x48xf32>
    %73 = tpu.matmul %70, %72, %cst_42 {dimension_numbers = #tpu.dot_dimension_numbers<[1], [0], [0], [1], [0, 0, 1, 1], [], []>} : vector<32x16xbf16>, vector<16x48xbf16>, vector<32x48xf32> -> vector<32x48xf32>
    %74 = vector.extract_strided_slice %73 {offsets = [0, 16], sizes = [32, 16], strides = [1, 1]} : vector<32x48xf32> to vector<32x16xf32>
    %cst_43 = arith.constant 0.000000e+00 : f32
    %75 = vector.broadcast %cst_43 : f32 to vector<4x16xf32>
    %76 = vector.extract_strided_slice %73 {offsets = [0, 0], sizes = [28, 16], strides = [1, 1]} : vector<32x48xf32> to vector<28x16xf32>
    %77 = tpu.concatenate %75, %76 in 0 : vector<4x16xf32>, vector<28x16xf32> -> vector<32x16xf32>
    %78 = arith.addf %74, %77 : vector<32x16xf32>
    %79 = vector.extract_strided_slice %73 {offsets = [4, 32], sizes = [28, 16], strides = [1, 1]} : vector<32x48xf32> to vector<28x16xf32>
    %80 = tpu.concatenate %79, %75 in 0 : vector<28x16xf32>, vector<4x16xf32> -> vector<32x16xf32>
    %81 = arith.addf %78, %80 : vector<32x16xf32>
    %c2_44 = arith.constant 2 : index
    %c0_45 = arith.constant 0 : index
    %c0_46 = arith.constant 0 : index
    %82 = vector.load %arg6[%c2_44, %c0_45, %c0_46] : memref<3x1x16xf32, #tpu.memory_space<vmem>>, vector<1x1x16xf32>
    %83 = vector.shape_cast %82 : vector<1x1x16xf32> to vector<1x16xf32>
    %84 = vector.broadcast %83 : vector<1x16xf32> to vector<32x16xf32>
    %85 = arith.addf %81, %84 : vector<32x16xf32>
    %cst_47 = arith.constant 0.000000e+00 : f32
    %86 = vector.broadcast %cst_47 : f32 to vector<32x16xf32>
    %87 = arith.maximumf %85, %86 : vector<32x16xf32>
    %88 = arith.truncf %87 : vector<32x16xf32> to vector<32x16xbf16>
    %c2_48 = arith.constant 2 : index
    %c0_49 = arith.constant 0 : index
    %c0_50 = arith.constant 0 : index
    %89 = vector.load %arg7[%c2_48, %c0_49, %c0_50] : memref<3x16x16xbf16, #tpu.memory_space<vmem>>, vector<1x16x16xbf16>
    %90 = vector.shape_cast %89 : vector<1x16x16xbf16> to vector<16x16xbf16>
    %cst_51 = arith.constant dense<0.000000e+00> : vector<32x16xf32>
    %91 = tpu.matmul %88, %90, %cst_51 {dimension_numbers = #tpu.dot_dimension_numbers<[1], [0], [0], [1], [0, 0, 1, 1], [], []>} : vector<32x16xbf16>, vector<16x16xbf16>, vector<32x16xf32> -> vector<32x16xf32>
    %c2_52 = arith.constant 2 : index
    %c0_53 = arith.constant 0 : index
    %c0_54 = arith.constant 0 : index
    %92 = vector.load %arg8[%c2_52, %c0_53, %c0_54] : memref<3x1x16xf32, #tpu.memory_space<vmem>>, vector<1x1x16xf32>
    %93 = vector.shape_cast %92 : vector<1x1x16xf32> to vector<1x16xf32>
    %94 = vector.broadcast %93 : vector<1x16xf32> to vector<32x16xf32>
    %95 = arith.addf %91, %94 : vector<32x16xf32>
    %96 = arith.addf %69, %95 : vector<32x16xf32>
    %97 = vector.broadcast %1 : vector<32x1xf32> to vector<32x16xf32>
    %98 = arith.mulf %96, %97 : vector<32x16xf32>
    %99 = arith.truncf %98 : vector<32x16xf32> to vector<32x16xbf16>
    %c0_55 = arith.constant 0 : index
    %c0_56 = arith.constant 0 : index
    %100 = vector.load %arg9[%c0_55, %c0_56] : memref<16x10xbf16, #tpu.memory_space<vmem>>, vector<16x10xbf16>
    %cst_57 = arith.constant dense<0.000000e+00> : vector<32x10xf32>
    %101 = tpu.matmul %99, %100, %cst_57 {dimension_numbers = #tpu.dot_dimension_numbers<[1], [0], [0], [1], [0, 0, 1, 1], [], []>} : vector<32x16xbf16>, vector<16x10xbf16>, vector<32x10xf32> -> vector<32x10xf32>
    %c0_58 = arith.constant 0 : index
    %c0_59 = arith.constant 0 : index
    %102 = vector.load %arg10[%c0_58, %c0_59] : memref<1x10xf32, #tpu.memory_space<vmem>>, vector<1x10xf32>
    %103 = vector.broadcast %102 : vector<1x10xf32> to vector<32x10xf32>
    %104 = arith.addf %101, %103 : vector<32x10xf32>
    %105 = vector.broadcast %1 : vector<32x1xf32> to vector<32x10xf32>
    %106 = arith.mulf %104, %105 : vector<32x10xf32>
    %c0_60 = arith.constant 0 : index
    %c0_61 = arith.constant 0 : index
    %c0_62 = arith.constant 0 : index
    %107 = vector.load %arg11[%c0_60, %c0_61, %c0_62] : memref<1x32x10xf32, #tpu.memory_space<vmem>>, vector<1x32x10xf32>
    %108 = vector.shape_cast %107 : vector<1x32x10xf32> to vector<32x10xf32>
    %109 = vector.shape_cast %106 : vector<32x10xf32> to vector<1x32x10xf32>
    tpu.vector_store %arg11[%c0_60, %c0_61, %c0_62], %109 {strides = array<i32>} : memref<1x32x10xf32, #tpu.memory_space<vmem>>, vector<1x32x10xf32>,
    return
  }
  func.func @transform_0(%arg0: i32) -> (i32, i32, i32) {
    %c0_i32 = arith.constant 0 : i32
    %c0_i32_0 = arith.constant 0 : i32
    %c0_i32_1 = arith.constant 0 : i32
    return %arg0, %c0_i32, %c0_i32_0 : i32, i32, i32
  }
  func.func @transform_1(%arg0: i32) -> (i32, i32, i32) {
    %c0_i32 = arith.constant 0 : i32
    %c0_i32_0 = arith.constant 0 : i32
    %c0_i32_1 = arith.constant 0 : i32
    return %arg0, %c0_i32, %c0_i32_0 : i32, i32, i32
  }
  func.func @transform_2(%arg0: i32) -> (i32, i32) {
    %c0_i32 = arith.constant 0 : i32
    %c0_i32_0 = arith.constant 0 : i32
    %c0_i32_1 = arith.constant 0 : i32
    return %c0_i32, %c0_i32_0 : i32, i32
  }
  func.func @transform_3(%arg0: i32) -> (i32, i32) {
    %c0_i32 = arith.constant 0 : i32
    %c0_i32_0 = arith.constant 0 : i32
    %c0_i32_1 = arith.constant 0 : i32
    return %c0_i32, %c0_i32_0 : i32, i32
  }
  func.func @transform_4(%arg0: i32) -> (i32, i32, i32) {
    %c0_i32 = arith.constant 0 : i32
    %c0_i32_0 = arith.constant 0 : i32
    %c0_i32_1 = arith.constant 0 : i32
    %c0_i32_2 = arith.constant 0 : i32
    return %c0_i32, %c0_i32_0, %c0_i32_1 : i32, i32, i32
  }
  func.func @transform_5(%arg0: i32) -> (i32, i32, i32) {
    %c0_i32 = arith.constant 0 : i32
    %c0_i32_0 = arith.constant 0 : i32
    %c0_i32_1 = arith.constant 0 : i32
    %c0_i32_2 = arith.constant 0 : i32
    return %c0_i32, %c0_i32_0, %c0_i32_1 : i32, i32, i32
  }
  func.func @transform_6(%arg0: i32) -> (i32, i32, i32) {
    %c0_i32 = arith.constant 0 : i32
    %c0_i32_0 = arith.constant 0 : i32
    %c0_i32_1 = arith.constant 0 : i32
    %c0_i32_2 = arith.constant 0 : i32
    return %c0_i32, %c0_i32_0, %c0_i32_1 : i32, i32, i32
  }
  func.func @transform_7(%arg0: i32) -> (i32, i32, i32) {
    %c0_i32 = arith.constant 0 : i32
    %c0_i32_0 = arith.constant 0 : i32
    %c0_i32_1 = arith.constant 0 : i32
    %c0_i32_2 = arith.constant 0 : i32
    return %c0_i32, %c0_i32_0, %c0_i32_1 : i32, i32, i32
  }
  func.func @transform_8(%arg0: i32) -> (i32, i32) {
    %c0_i32 = arith.constant 0 : i32
    %c0_i32_0 = arith.constant 0 : i32
    %c0_i32_1 = arith.constant 0 : i32
    return %c0_i32, %c0_i32_0 : i32, i32
  }
  func.func @transform_9(%arg0: i32) -> (i32, i32) {
    %c0_i32 = arith.constant 0 : i32
    %c0_i32_0 = arith.constant 0 : i32
    %c0_i32_1 = arith.constant 0 : i32
    return %c0_i32, %c0_i32_0 : i32, i32
  }
  func.func @transform_10(%arg0: i32) -> (i32, i32, i32) {
    %c0_i32 = arith.constant 0 : i32
    %c0_i32_0 = arith.constant 0 : i32
    %c0_i32_1 = arith.constant 0 : i32
    return %arg0, %c0_i32, %c0_i32_0 : i32, i32, i32
  }
}

module attributes {stable_mosaic.version = 11 : i64} {
  func.func @_ss_tcn_stage_kernel(%arg0: i32, %arg1: memref<1x32x10xf32, #tpu.memory_space<vmem>>, %arg2: memref<1x32x1xf32, #tpu.memory_space<vmem>>, %arg3: memref<10x16xbf16, #tpu.memory_space<vmem>>, %arg4: memref<1x16xf32, #tpu.memory_space<vmem>>, %arg5: memref<3x16x48xbf16, #tpu.memory_space<vmem>>, %arg6: memref<3x1x16xf32, #tpu.memory_space<vmem>>, %arg7: memref<3x16x16xbf16, #tpu.memory_space<vmem>>, %arg8: memref<3x1x16xf32, #tpu.memory_space<vmem>>, %arg9: memref<16x10xbf16, #tpu.memory_space<vmem>>, %arg10: memref<1x10xf32, #tpu.memory_space<vmem>>, %arg11: memref<1x32x10xf32, #tpu.memory_space<vmem>>) attributes {dimension_semantics = [#tpu.dimension_semantics<parallel>], iteration_bounds = array<i64: 2>, scalar_prefetch = 0 : i64, scratch_operands = 0 : i64, tpu.core_type = #tpu.core_type<tc>, window_params = [{transform_indices = @transform_0, window_bounds = array<i64: 1, 32, 10>}, {transform_indices = @transform_1, window_bounds = array<i64: 1, 32, 1>}, {pipeline_mode = #tpu.pipeline_mode<synchronous>, transform_indices = @transform_2, window_bounds = array<i64: 10, 16>}, {pipeline_mode = #tpu.pipeline_mode<synchronous>, transform_indices = @transform_3, window_bounds = array<i64: 1, 16>}, {pipeline_mode = #tpu.pipeline_mode<synchronous>, transform_indices = @transform_4, window_bounds = array<i64: 3, 16, 48>}, {pipeline_mode = #tpu.pipeline_mode<synchronous>, transform_indices = @transform_5, window_bounds = array<i64: 3, 1, 16>}, {pipeline_mode = #tpu.pipeline_mode<synchronous>, transform_indices = @transform_6, window_bounds = array<i64: 3, 16, 16>}, {pipeline_mode = #tpu.pipeline_mode<synchronous>, transform_indices = @transform_7, window_bounds = array<i64: 3, 1, 16>}, {pipeline_mode = #tpu.pipeline_mode<synchronous>, transform_indices = @transform_8, window_bounds = array<i64: 16, 10>}, {pipeline_mode = #tpu.pipeline_mode<synchronous>, transform_indices = @transform_9, window_bounds = array<i64: 1, 10>}, {transform_indices = @transform_10, window_bounds = array<i64: 1, 32, 10>}]} {
    %c0 = arith.constant 0 : index
    %c0_0 = arith.constant 0 : index
    %c0_1 = arith.constant 0 : index
    %0 = vector.load %arg2[%c0, %c0_0, %c0_1] : memref<1x32x1xf32, #tpu.memory_space<vmem>>, vector<1x32x1xf32>
    %1 = vector.shape_cast %0 : vector<1x32x1xf32> to vector<32x1xf32>
    %c0_2 = arith.constant 0 : index
    %c0_3 = arith.constant 0 : index
    %c0_4 = arith.constant 0 : index
    %2 = vector.load %arg1[%c0_2, %c0_3, %c0_4] : memref<1x32x10xf32, #tpu.memory_space<vmem>>, vector<1x32x10xf32>
    %3 = vector.shape_cast %2 : vector<1x32x10xf32> to vector<32x10xf32>
    %4 = arith.truncf %3 : vector<32x10xf32> to vector<32x10xbf16>
    %c0_5 = arith.constant 0 : index
    %c0_6 = arith.constant 0 : index
    %5 = vector.load %arg3[%c0_5, %c0_6] : memref<10x16xbf16, #tpu.memory_space<vmem>>, vector<10x16xbf16>
    %cst = arith.constant dense<0.000000e+00> : vector<32x16xf32>
    %6 = tpu.matmul %4, %5, %cst {dimension_numbers = #tpu.dot_dimension_numbers<[1], [0], [0], [1], [0, 0, 1, 1], [], []>} : vector<32x10xbf16>, vector<10x16xbf16>, vector<32x16xf32> -> vector<32x16xf32>
    %c0_7 = arith.constant 0 : index
    %c0_8 = arith.constant 0 : index
    %7 = vector.load %arg4[%c0_7, %c0_8] : memref<1x16xf32, #tpu.memory_space<vmem>>, vector<1x16xf32>
    %8 = vector.broadcast %7 : vector<1x16xf32> to vector<32x16xf32>
    %9 = arith.addf %6, %8 : vector<32x16xf32>
    %10 = vector.broadcast %1 : vector<32x1xf32> to vector<32x16xf32>
    %11 = arith.mulf %9, %10 : vector<32x16xf32>
    %12 = arith.truncf %11 : vector<32x16xf32> to vector<32x16xbf16>
    %c0_9 = arith.constant 0 : index
    %c0_10 = arith.constant 0 : index
    %c0_11 = arith.constant 0 : index
    %13 = vector.load %arg5[%c0_9, %c0_10, %c0_11] : memref<3x16x48xbf16, #tpu.memory_space<vmem>>, vector<1x16x48xbf16>
    %14 = vector.shape_cast %13 : vector<1x16x48xbf16> to vector<16x48xbf16>
    %cst_12 = arith.constant dense<0.000000e+00> : vector<32x48xf32>
    %15 = tpu.matmul %12, %14, %cst_12 {dimension_numbers = #tpu.dot_dimension_numbers<[1], [0], [0], [1], [0, 0, 1, 1], [], []>} : vector<32x16xbf16>, vector<16x48xbf16>, vector<32x48xf32> -> vector<32x48xf32>
    %16 = vector.extract_strided_slice %15 {offsets = [0, 16], sizes = [32, 16], strides = [1, 1]} : vector<32x48xf32> to vector<32x16xf32>
    %cst_13 = arith.constant 0.000000e+00 : f32
    %17 = vector.broadcast %cst_13 : f32 to vector<1x16xf32>
    %18 = vector.extract_strided_slice %15 {offsets = [0, 0], sizes = [31, 16], strides = [1, 1]} : vector<32x48xf32> to vector<31x16xf32>
    %19 = tpu.concatenate %17, %18 in 0 : vector<1x16xf32>, vector<31x16xf32> -> vector<32x16xf32>
    %20 = arith.addf %16, %19 : vector<32x16xf32>
    %21 = vector.extract_strided_slice %15 {offsets = [1, 32], sizes = [31, 16], strides = [1, 1]} : vector<32x48xf32> to vector<31x16xf32>
    %22 = tpu.concatenate %21, %17 in 0 : vector<31x16xf32>, vector<1x16xf32> -> vector<32x16xf32>
    %23 = arith.addf %20, %22 : vector<32x16xf32>
    %c0_14 = arith.constant 0 : index
    %c0_15 = arith.constant 0 : index
    %c0_16 = arith.constant 0 : index
    %24 = vector.load %arg6[%c0_14, %c0_15, %c0_16] : memref<3x1x16xf32, #tpu.memory_space<vmem>>, vector<1x1x16xf32>
    %25 = vector.shape_cast %24 : vector<1x1x16xf32> to vector<1x16xf32>
    %26 = vector.broadcast %25 : vector<1x16xf32> to vector<32x16xf32>
    %27 = arith.addf %23, %26 : vector<32x16xf32>
    %cst_17 = arith.constant 0.000000e+00 : f32
    %28 = vector.broadcast %cst_17 : f32 to vector<32x16xf32>
    %29 = arith.maximumf %27, %28 : vector<32x16xf32>
    %30 = arith.truncf %29 : vector<32x16xf32> to vector<32x16xbf16>
    %c0_18 = arith.constant 0 : index
    %c0_19 = arith.constant 0 : index
    %c0_20 = arith.constant 0 : index
    %31 = vector.load %arg7[%c0_18, %c0_19, %c0_20] : memref<3x16x16xbf16, #tpu.memory_space<vmem>>, vector<1x16x16xbf16>
    %32 = vector.shape_cast %31 : vector<1x16x16xbf16> to vector<16x16xbf16>
    %cst_21 = arith.constant dense<0.000000e+00> : vector<32x16xf32>
    %33 = tpu.matmul %30, %32, %cst_21 {dimension_numbers = #tpu.dot_dimension_numbers<[1], [0], [0], [1], [0, 0, 1, 1], [], []>} : vector<32x16xbf16>, vector<16x16xbf16>, vector<32x16xf32> -> vector<32x16xf32>
    %c0_22 = arith.constant 0 : index
    %c0_23 = arith.constant 0 : index
    %c0_24 = arith.constant 0 : index
    %34 = vector.load %arg8[%c0_22, %c0_23, %c0_24] : memref<3x1x16xf32, #tpu.memory_space<vmem>>, vector<1x1x16xf32>
    %35 = vector.shape_cast %34 : vector<1x1x16xf32> to vector<1x16xf32>
    %36 = vector.broadcast %35 : vector<1x16xf32> to vector<32x16xf32>
    %37 = arith.addf %33, %36 : vector<32x16xf32>
    %38 = arith.addf %11, %37 : vector<32x16xf32>
    %39 = vector.broadcast %1 : vector<32x1xf32> to vector<32x16xf32>
    %40 = arith.mulf %38, %39 : vector<32x16xf32>
    %41 = arith.truncf %40 : vector<32x16xf32> to vector<32x16xbf16>
    %c1 = arith.constant 1 : index
    %c0_25 = arith.constant 0 : index
    %c0_26 = arith.constant 0 : index
    %42 = vector.load %arg5[%c1, %c0_25, %c0_26] : memref<3x16x48xbf16, #tpu.memory_space<vmem>>, vector<1x16x48xbf16>
    %43 = vector.shape_cast %42 : vector<1x16x48xbf16> to vector<16x48xbf16>
    %cst_27 = arith.constant dense<0.000000e+00> : vector<32x48xf32>
    %44 = tpu.matmul %41, %43, %cst_27 {dimension_numbers = #tpu.dot_dimension_numbers<[1], [0], [0], [1], [0, 0, 1, 1], [], []>} : vector<32x16xbf16>, vector<16x48xbf16>, vector<32x48xf32> -> vector<32x48xf32>
    %45 = vector.extract_strided_slice %44 {offsets = [0, 16], sizes = [32, 16], strides = [1, 1]} : vector<32x48xf32> to vector<32x16xf32>
    %cst_28 = arith.constant 0.000000e+00 : f32
    %46 = vector.broadcast %cst_28 : f32 to vector<2x16xf32>
    %47 = vector.extract_strided_slice %44 {offsets = [0, 0], sizes = [30, 16], strides = [1, 1]} : vector<32x48xf32> to vector<30x16xf32>
    %48 = tpu.concatenate %46, %47 in 0 : vector<2x16xf32>, vector<30x16xf32> -> vector<32x16xf32>
    %49 = arith.addf %45, %48 : vector<32x16xf32>
    %50 = vector.extract_strided_slice %44 {offsets = [2, 32], sizes = [30, 16], strides = [1, 1]} : vector<32x48xf32> to vector<30x16xf32>
    %51 = tpu.concatenate %50, %46 in 0 : vector<30x16xf32>, vector<2x16xf32> -> vector<32x16xf32>
    %52 = arith.addf %49, %51 : vector<32x16xf32>
    %c1_29 = arith.constant 1 : index
    %c0_30 = arith.constant 0 : index
    %c0_31 = arith.constant 0 : index
    %53 = vector.load %arg6[%c1_29, %c0_30, %c0_31] : memref<3x1x16xf32, #tpu.memory_space<vmem>>, vector<1x1x16xf32>
    %54 = vector.shape_cast %53 : vector<1x1x16xf32> to vector<1x16xf32>
    %55 = vector.broadcast %54 : vector<1x16xf32> to vector<32x16xf32>
    %56 = arith.addf %52, %55 : vector<32x16xf32>
    %cst_32 = arith.constant 0.000000e+00 : f32
    %57 = vector.broadcast %cst_32 : f32 to vector<32x16xf32>
    %58 = arith.maximumf %56, %57 : vector<32x16xf32>
    %59 = arith.truncf %58 : vector<32x16xf32> to vector<32x16xbf16>
    %c1_33 = arith.constant 1 : index
    %c0_34 = arith.constant 0 : index
    %c0_35 = arith.constant 0 : index
    %60 = vector.load %arg7[%c1_33, %c0_34, %c0_35] : memref<3x16x16xbf16, #tpu.memory_space<vmem>>, vector<1x16x16xbf16>
    %61 = vector.shape_cast %60 : vector<1x16x16xbf16> to vector<16x16xbf16>
    %cst_36 = arith.constant dense<0.000000e+00> : vector<32x16xf32>
    %62 = tpu.matmul %59, %61, %cst_36 {dimension_numbers = #tpu.dot_dimension_numbers<[1], [0], [0], [1], [0, 0, 1, 1], [], []>} : vector<32x16xbf16>, vector<16x16xbf16>, vector<32x16xf32> -> vector<32x16xf32>
    %c1_37 = arith.constant 1 : index
    %c0_38 = arith.constant 0 : index
    %c0_39 = arith.constant 0 : index
    %63 = vector.load %arg8[%c1_37, %c0_38, %c0_39] : memref<3x1x16xf32, #tpu.memory_space<vmem>>, vector<1x1x16xf32>
    %64 = vector.shape_cast %63 : vector<1x1x16xf32> to vector<1x16xf32>
    %65 = vector.broadcast %64 : vector<1x16xf32> to vector<32x16xf32>
    %66 = arith.addf %62, %65 : vector<32x16xf32>
    %67 = arith.addf %40, %66 : vector<32x16xf32>
    %68 = vector.broadcast %1 : vector<32x1xf32> to vector<32x16xf32>
    %69 = arith.mulf %67, %68 : vector<32x16xf32>
    %70 = arith.truncf %69 : vector<32x16xf32> to vector<32x16xbf16>
    %c2 = arith.constant 2 : index
    %c0_40 = arith.constant 0 : index
    %c0_41 = arith.constant 0 : index
    %71 = vector.load %arg5[%c2, %c0_40, %c0_41] : memref<3x16x48xbf16, #tpu.memory_space<vmem>>, vector<1x16x48xbf16>
    %72 = vector.shape_cast %71 : vector<1x16x48xbf16> to vector<16x48xbf16>
    %cst_42 = arith.constant dense<0.000000e+00> : vector<32x48xf32>
    %73 = tpu.matmul %70, %72, %cst_42 {dimension_numbers = #tpu.dot_dimension_numbers<[1], [0], [0], [1], [0, 0, 1, 1], [], []>} : vector<32x16xbf16>, vector<16x48xbf16>, vector<32x48xf32> -> vector<32x48xf32>
    %74 = vector.extract_strided_slice %73 {offsets = [0, 16], sizes = [32, 16], strides = [1, 1]} : vector<32x48xf32> to vector<32x16xf32>
    %cst_43 = arith.constant 0.000000e+00 : f32
    %75 = vector.broadcast %cst_43 : f32 to vector<4x16xf32>
    %76 = vector.extract_strided_slice %73 {offsets = [0, 0], sizes = [28, 16], strides = [1, 1]} : vector<32x48xf32> to vector<28x16xf32>
    %77 = tpu.concatenate %75, %76 in 0 : vector<4x16xf32>, vector<28x16xf32> -> vector<32x16xf32>
    %78 = arith.addf %74, %77 : vector<32x16xf32>
    %79 = vector.extract_strided_slice %73 {offsets = [4, 32], sizes = [28, 16], strides = [1, 1]} : vector<32x48xf32> to vector<28x16xf32>
    %80 = tpu.concatenate %79, %75 in 0 : vector<28x16xf32>, vector<4x16xf32> -> vector<32x16xf32>
    %81 = arith.addf %78, %80 : vector<32x16xf32>
    %c2_44 = arith.constant 2 : index
    %c0_45 = arith.constant 0 : index
    %c0_46 = arith.constant 0 : index
    %82 = vector.load %arg6[%c2_44, %c0_45, %c0_46] : memref<3x1x16xf32, #tpu.memory_space<vmem>>, vector<1x1x16xf32>
    %83 = vector.shape_cast %82 : vector<1x1x16xf32> to vector<1x16xf32>
    %84 = vector.broadcast %83 : vector<1x16xf32> to vector<32x16xf32>
    %85 = arith.addf %81, %84 : vector<32x16xf32>
    %cst_47 = arith.constant 0.000000e+00 : f32
    %86 = vector.broadcast %cst_47 : f32 to vector<32x16xf32>
    %87 = arith.maximumf %85, %86 : vector<32x16xf32>
    %88 = arith.truncf %87 : vector<32x16xf32> to vector<32x16xbf16>
    %c2_48 = arith.constant 2 : index
    %c0_49 = arith.constant 0 : index
    %c0_50 = arith.constant 0 : index
    %89 = vector.load %arg7[%c2_48, %c0_49, %c0_50] : memref<3x16x16xbf16, #tpu.memory_space<vmem>>, vector<1x16x16xbf16>
    %90 = vector.shape_cast %89 : vector<1x16x16xbf16> to vector<16x16xbf16>
    %cst_51 = arith.constant dense<0.000000e+00> : vector<32x16xf32>
    %91 = tpu.matmul %88, %90, %cst_51 {dimension_numbers = #tpu.dot_dimension_numbers<[1], [0], [0], [1], [0, 0, 1, 1], [], []>} : vector<32x16xbf16>, vector<16x16xbf16>, vector<32x16xf32> -> vector<32x16xf32>
    %c2_52 = arith.constant 2 : index
    %c0_53 = arith.constant 0 : index
    %c0_54 = arith.constant 0 : index
    %92 = vector.load %arg8[%c2_52, %c0_53, %c0_54] : memref<3x1x16xf32, #tpu.memory_space<vmem>>, vector<1x1x16xf32>
    %93 = vector.shape_cast %92 : vector<1x1x16xf32> to vector<1x16xf32>
    %94 = vector.broadcast %93 : vector<1x16xf32> to vector<32x16xf32>
    %95 = arith.addf %91, %94 : vector<32x16xf32>
    %96 = arith.addf %69, %95 : vector<32x16xf32>
    %97 = vector.broadcast %1 : vector<32x1xf32> to vector<32x16xf32>
    %98 = arith.mulf %96, %97 : vector<32x16xf32>
    %99 = arith.truncf %98 : vector<32x16xf32> to vector<32x16xbf16>
    %c0_55 = arith.constant 0 : index
    %c0_56 = arith.constant 0 : index
    %100 = vector.load %arg9[%c0_55, %c0_56] : memref<16x10xbf16, #tpu.memory_space<vmem>>, vector<16x10xbf16>
    %cst_57 = arith.constant dense<0.000000e+00> : vector<32x10xf32>
    %101 = tpu.matmul %99, %100, %cst_57 {dimension_numbers = #tpu.dot_dimension_numbers<[1], [0], [0], [1], [0, 0, 1, 1], [], []>} : vector<32x16xbf16>, vector<16x10xbf16>, vector<32x10xf32> -> vector<32x10xf32>
    %c0_58 = arith.constant 0 : index
    %c0_59 = arith.constant 0 : index
    %102 = vector.load %arg10[%c0_58, %c0_59] : memref<1x10xf32, #tpu.memory_space<vmem>>, vector<1x10xf32>
    %103 = vector.broadcast %102 : vector<1x10xf32> to vector<32x10xf32>
    %104 = arith.addf %101, %103 : vector<32x10xf32>
    %105 = vector.broadcast %1 : vector<32x1xf32> to vector<32x10xf32>
    %106 = arith.mulf %104, %105 : vector<32x10xf32>
    %c0_60 = arith.constant 0 : index
    %c0_61 = arith.constant 0 : index
    %c0_62 = arith.constant 0 : index
    %107 = vector.load %arg11[%c0_60, %c0_61, %c0_62] : memref<1x32x10xf32, #tpu.memory_space<vmem>>, vector<1x32x10xf32>
    %108 = vector.shape_cast %107 : vector<1x32x10xf32> to vector<32x10xf32>
    %109 = vector.shape_cast %106 : vector<32x10xf32> to vector<1x32x10xf32>
    tpu.vector_store %arg11[%c0_60, %c0_61, %c0_62], %109 {strides = array<i32>} : memref<1x32x10xf32, #tpu.memory_space<vmem>>, vector<1x32x10xf32>,
    return
  }
  func.func @transform_0(%arg0: i32) -> (i32, i32, i32) {
    %c0_i32 = arith.constant 0 : i32
    %c0_i32_0 = arith.constant 0 : i32
    %c0_i32_1 = arith.constant 0 : i32
    return %arg0, %c0_i32, %c0_i32_0 : i32, i32, i32
  }
  func.func @transform_1(%arg0: i32) -> (i32, i32, i32) {
    %c0_i32 = arith.constant 0 : i32
    %c0_i32_0 = arith.constant 0 : i32
    %c0_i32_1 = arith.constant 0 : i32
    return %arg0, %c0_i32, %c0_i32_0 : i32, i32, i32
  }
  func.func @transform_2(%arg0: i32) -> (i32, i32) {
    %c0_i32 = arith.constant 0 : i32
    %c0_i32_0 = arith.constant 0 : i32
    %c0_i32_1 = arith.constant 0 : i32
    return %c0_i32, %c0_i32_0 : i32, i32
  }
  func.func @transform_3(%arg0: i32) -> (i32, i32) {
    %c0_i32 = arith.constant 0 : i32
    %c0_i32_0 = arith.constant 0 : i32
    %c0_i32_1 = arith.constant 0 : i32
    return %c0_i32, %c0_i32_0 : i32, i32
  }
  func.func @transform_4(%arg0: i32) -> (i32, i32, i32) {
    %c0_i32 = arith.constant 0 : i32
    %c0_i32_0 = arith.constant 0 : i32
    %c0_i32_1 = arith.constant 0 : i32
    %c0_i32_2 = arith.constant 0 : i32
    return %c0_i32, %c0_i32_0, %c0_i32_1 : i32, i32, i32
  }
  func.func @transform_5(%arg0: i32) -> (i32, i32, i32) {
    %c0_i32 = arith.constant 0 : i32
    %c0_i32_0 = arith.constant 0 : i32
    %c0_i32_1 = arith.constant 0 : i32
    %c0_i32_2 = arith.constant 0 : i32
    return %c0_i32, %c0_i32_0, %c0_i32_1 : i32, i32, i32
  }
  func.func @transform_6(%arg0: i32) -> (i32, i32, i32) {
    %c0_i32 = arith.constant 0 : i32
    %c0_i32_0 = arith.constant 0 : i32
    %c0_i32_1 = arith.constant 0 : i32
    %c0_i32_2 = arith.constant 0 : i32
    return %c0_i32, %c0_i32_0, %c0_i32_1 : i32, i32, i32
  }
  func.func @transform_7(%arg0: i32) -> (i32, i32, i32) {
    %c0_i32 = arith.constant 0 : i32
    %c0_i32_0 = arith.constant 0 : i32
    %c0_i32_1 = arith.constant 0 : i32
    %c0_i32_2 = arith.constant 0 : i32
    return %c0_i32, %c0_i32_0, %c0_i32_1 : i32, i32, i32
  }
  func.func @transform_8(%arg0: i32) -> (i32, i32) {
    %c0_i32 = arith.constant 0 : i32
    %c0_i32_0 = arith.constant 0 : i32
    %c0_i32_1 = arith.constant 0 : i32
    return %c0_i32, %c0_i32_0 : i32, i32
  }
  func.func @transform_9(%arg0: i32) -> (i32, i32) {
    %c0_i32 = arith.constant 0 : i32
    %c0_i32_0 = arith.constant 0 : i32
    %c0_i32_1 = arith.constant 0 : i32
    return %c0_i32, %c0_i32_0 : i32, i32
  }
  func.func @transform_10(%arg0: i32) -> (i32, i32, i32) {
    %c0_i32 = arith.constant 0 : i32
    %c0_i32_0 = arith.constant 0 : i32
    %c0_i32_1 = arith.constant 0 : i32
    return %arg0, %c0_i32, %c0_i32_0 : i32, i32, i32
  }
}

</mosaic_0001>

<llo_original>
// kernel: _lambda_.2
$region0: #{_lambda_.2}
  #allocation0 [shape = 'u32[]', space=smem, size = 0x4, offset = 0x4, fixed_abs, tag = 'smem constant byte address 0x4 - core index']
  #allocation1 [shape = 'u32[144,128]{1,0:T(1,128)}', space=vmem, size = 0x12000, scoped, tag = 'internal scratch']
  %s0 = inlined_call_operand.vmem [shape: f32[2,32,8], index: 0, kind: input, shape index: {}]
  %s1 = inlined_call_operand.vmem [shape: f32[2,32,1], index: 1, kind: input, shape index: {}]
  %s2 = inlined_call_operand.vmem [shape: bf16[8,16], index: 2, kind: input, shape index: {}]
  %s3 = inlined_call_operand.vmem [shape: f32[1,16], index: 3, kind: input, shape index: {}]
  %s4 = inlined_call_operand.vmem [shape: bf16[3,16,48], index: 4, kind: input, shape index: {}]
  %s5 = inlined_call_operand.vmem [shape: f32[3,1,16], index: 5, kind: input, shape index: {}]
  %s6 = inlined_call_operand.vmem [shape: bf16[3,16,16], index: 6, kind: input, shape index: {}]
  %s7 = inlined_call_operand.vmem [shape: f32[3,1,16], index: 7, kind: input, shape index: {}]
  %s8 = inlined_call_operand.vmem [shape: bf16[16,10], index: 8, kind: input, shape index: {}]
  %s9 = inlined_call_operand.vmem [shape: f32[1,10], index: 9, kind: input, shape index: {}]
  %s10 = inlined_call_operand.vmem [shape: f32[2,32,10], index: 10, kind: output, shape index: {}]
  %s11 = sld [smem:[#allocation0]]
  $region73: #{_lambda_.2} parent=0
    _
  %s13 = ssub.s32 1, %s11
  %s14 = scalar_select 0, %s13, %s11
  loop: start=0, step=1, limit=4
  $region2: #{_lambda_.2} parent=0 // loop_pre_header
    _
  $region3: #{_lambda_.2} parent=0 // loop_header
    %s16 = sphi 0, %s20
    %p17 = scmp.ge.s32.totalorder %s16, 4
    %s26 = sphi 0, %s28
    %s29 = sphi 0, %s26
    %s30 = sphi 0, %s29
    %s46 = sphi 0, %s30
    %s52 = sphi 0, %s54
    %s55 = sphi 0, %s52
    %s56 = sphi 0, %s55
    %s72 = sphi 0, %s56
    %s76 = sphi 0, %s76
    %s78 = sphi 0, %s76
    %s79 = sphi 0, %s78
    %s93 = sphi 0, %s79
    %s97 = sphi 0, %s97
    %s99 = sphi 0, %s97
    %s100 = sphi 0, %s99
    %s114 = sphi 0, %s100
    %s118 = sphi 0, %s118
    %s120 = sphi 0, %s118
    %s121 = sphi 0, %s120
    %s135 = sphi 0, %s121
    %s139 = sphi 0, %s139
    %s141 = sphi 0, %s139
    %s142 = sphi 0, %s141
    %s156 = sphi 0, %s142
    %s160 = sphi 0, %s160
    %s162 = sphi 0, %s160
    %s163 = sphi 0, %s162
    %s177 = sphi 0, %s163
    %s181 = sphi 0, %s181
    %s183 = sphi 0, %s181
    %s184 = sphi 0, %s183
    %s198 = sphi 0, %s184
    %s202 = sphi 0, %s202
    %s204 = sphi 0, %s202
    %s205 = sphi 0, %s204
    %s219 = sphi 0, %s205
    %s223 = sphi 0, %s223
    %s225 = sphi 0, %s223
    %s226 = sphi 0, %s225
    %s240 = sphi 0, %s226
    %s246 = sphi 0, %s248
    %s249 = sphi 0, %s246
    %s250 = sphi 0, %s249
    %s266 = sphi 0, %s250
  $region4: #{_lambda_.2} parent=0 // loop_header_branch
    %19 = sbr.rel (%p17) target = $region8
  $region5: #{_lambda_.2} parent=0 // loop_body
    %s21 = ssub.s32 %s16, 1
    %s22 = ssub.s32 %s16, 2
    %s23 = sadd.s32 %s16, 1
    %s24 = ssub.s32 %s16, %s23
    %p25 = scmp.eq.s32.totalorder %s24, 0
    %s27 = sadd.s32 %s26, 1
    %s28 = scalar_select %p25, %s26, %s27
    %p31 = pneg %p25
    %p32 = scmp.eq.s32.totalorder %s16, 1
    %p33 = por %p31, %p32
    %p34 = scmp.ne.s32.totalorder %s26, %s29
    %p35 = scmp.eq.s32.totalorder %s16, 0
    %p36 = por %p34, %p35
    %p37 = scmp.ne.s32.totalorder %s26, %s29
    %p38 = scmp.eq.s32.totalorder %s21, 1
    %p39 = por %p37, %p38
    %p40 = scmp.ne.s32.totalorder %s29, %s30
    %p41 = scmp.eq.s32.totalorder %s21, 0
    %p42 = por %p40, %p41
    %p43 = scmp.ne.s32.totalorder %s29, %s30
    %p44 = scmp.eq.s32.totalorder %s22, 1
    %p45 = por %p43, %p44
    %p47 = scmp.ne.s32.totalorder %s30, %s46
    %p48 = scmp.eq.s32.totalorder %s22, 0
    %p49 = por %p47, %p48
    %s50 = ssub.s32 %s16, %s23
    %p51 = scmp.eq.s32.totalorder %s50, 0
    %s53 = sadd.s32 %s52, 1
    %s54 = scalar_select %p51, %s52, %s53
    %p57 = pneg %p51
    %p58 = scmp.eq.s32.totalorder %s16, 1
    %p59 = por %p57, %p58
    %p60 = scmp.ne.s32.totalorder %s52, %s55
    %p61 = scmp.eq.s32.totalorder %s16, 0
    %p62 = por %p60, %p61
    %p63 = scmp.ne.s32.totalorder %s52, %s55
    %p64 = scmp.eq.s32.totalorder %s21, 1
    %p65 = por %p63, %p64
    %p66 = scmp.ne.s32.totalorder %s55, %s56
    %p67 = scmp.eq.s32.totalorder %s21, 0
    %p68 = por %p66, %p67
    %p69 = scmp.ne.s32.totalorder %s55, %s56
    %p70 = scmp.eq.s32.totalorder %s22, 1
    %p71 = por %p69, %p70
    %p73 = scmp.ne.s32.totalorder %s56, %s72
    %p74 = scmp.eq.s32.totalorder %s22, 0
    %p75 = por %p73, %p74
    %s77 = sadd.s32 %s76, 1
    %p80 = scmp.eq.s32.totalorder %s16, 1
    %p81 = scmp.ne.s32.totalorder %s76, %s78
    %p82 = scmp.eq.s32.totalorder %s16, 0
    %p83 = por %p81, %p82
    %p84 = scmp.ne.s32.totalorder %s76, %s78
    %p85 = scmp.eq.s32.totalorder %s21, 1
    %p86 = por %p84, %p85
    %p87 = scmp.ne.s32.totalorder %s78, %s79
    %p88 = scmp.eq.s32.totalorder %s21, 0
    %p89 = por %p87, %p88
    %p90 = scmp.ne.s32.totalorder %s78, %s79
    %p91 = scmp.eq.s32.totalorder %s22, 1
    %p92 = por %p90, %p91
    %p94 = scmp.ne.s32.totalorder %s79, %s93
    %p95 = scmp.eq.s32.totalorder %s22, 0
    %p96 = por %p94, %p95
    %s98 = sadd.s32 %s97, 1
    %p101 = scmp.eq.s32.totalorder %s16, 1
    %p102 = scmp.ne.s32.totalorder %s97, %s99
    %p103 = scmp.eq.s32.totalorder %s16, 0
    %p104 = por %p102, %p103
    %p105 = scmp.ne.s32.totalorder %s97, %s99
    %p106 = scmp.eq.s32.totalorder %s21, 1
    %p107 = por %p105, %p106
    %p108 = scmp.ne.s32.totalorder %s99, %s100
    %p109 = scmp.eq.s32.totalorder %s21, 0
    %p110 = por %p108, %p109
    %p111 = scmp.ne.s32.totalorder %s99, %s100
    %p112 = scmp.eq.s32.totalorder %s22, 1
    %p113 = por %p111, %p112
    %p115 = scmp.ne.s32.totalorder %s100, %s114
    %p116 = scmp.eq.s32.totalorder %s22, 0
    %p117 = por %p115, %p116
    %s119 = sadd.s32 %s118, 1
    %p122 = scmp.eq.s32.totalorder %s16, 1
    %p123 = scmp.ne.s32.totalorder %s118, %s120
    %p124 = scmp.eq.s32.totalorder %s16, 0
    %p125 = por %p123, %p124
    %p126 = scmp.ne.s32.totalorder %s118, %s120
    %p127 = scmp.eq.s32.totalorder %s21, 1
    %p128 = por %p126, %p127
    %p129 = scmp.ne.s32.totalorder %s120, %s121
    %p130 = scmp.eq.s32.totalorder %s21, 0
    %p131 = por %p129, %p130
    %p132 = scmp.ne.s32.totalorder %s120, %s121
    %p133 = scmp.eq.s32.totalorder %s22, 1
    %p134 = por %p132, %p133
    %p136 = scmp.ne.s32.totalorder %s121, %s135
    %p137 = scmp.eq.s32.totalorder %s22, 0
    %p138 = por %p136, %p137
    %s140 = sadd.s32 %s139, 1
    %p143 = scmp.eq.s32.totalorder %s16, 1
    %p144 = scmp.ne.s32.totalorder %s139, %s141
    %p145 = scmp.eq.s32.totalorder %s16, 0
    %p146 = por %p144, %p145
    %p147 = scmp.ne.s32.totalorder %s139, %s141
    %p148 = scmp.eq.s32.totalorder %s21, 1
    %p149 = por %p147, %p148
    %p150 = scmp.ne.s32.totalorder %s141, %s142
    %p151 = scmp.eq.s32.totalorder %s21, 0
    %p152 = por %p150, %p151
    %p153 = scmp.ne.s32.totalorder %s141, %s142
    %p154 = scmp.eq.s32.totalorder %s22, 1
    %p155 = por %p153, %p154
    %p157 = scmp.ne.s32.totalorder %s142, %s156
    %p158 = scmp.eq.s32.totalorder %s22, 0
    %p159 = por %p157, %p158
    %s161 = sadd.s32 %s160, 1
    %p164 = scmp.eq.s32.totalorder %s16, 1
    %p165 = scmp.ne.s32.totalorder %s160, %s162
    %p166 = scmp.eq.s32.totalorder %s16, 0
    %p167 = por %p165, %p166
    %p168 = scmp.ne.s32.totalorder %s160, %s162
    %p169 = scmp.eq.s32.totalorder %s21, 1
    %p170 = por %p168, %p169
    %p171 = scmp.ne.s32.totalorder %s162, %s163
    %p172 = scmp.eq.s32.totalorder %s21, 0
    %p173 = por %p171, %p172
    %p174 = scmp.ne.s32.totalorder %s162, %s163
    %p175 = scmp.eq.s32.totalorder %s22, 1
    %p176 = por %p174, %p175
    %p178 = scmp.ne.s32.totalorder %s163, %s177
    %p179 = scmp.eq.s32.totalorder %s22, 0
    %p180 = por %p178, %p179
    %s182 = sadd.s32 %s181, 1
    %p185 = scmp.eq.s32.totalorder %s16, 1
    %p186 = scmp.ne.s32.totalorder %s181, %s183
    %p187 = scmp.eq.s32.totalorder %s16, 0
    %p188 = por %p186, %p187
    %p189 = scmp.ne.s32.totalorder %s181, %s183
    %p190 = scmp.eq.s32.totalorder %s21, 1
    %p191 = por %p189, %p190
    %p192 = scmp.ne.s32.totalorder %s183, %s184
    %p193 = scmp.eq.s32.totalorder %s21, 0
    %p194 = por %p192, %p193
    %p195 = scmp.ne.s32.totalorder %s183, %s184
    %p196 = scmp.eq.s32.totalorder %s22, 1
    %p197 = por %p195, %p196
    %p199 = scmp.ne.s32.totalorder %s184, %s198
    %p200 = scmp.eq.s32.totalorder %s22, 0
    %p201 = por %p199, %p200
    %s203 = sadd.s32 %s202, 1
    %p206 = scmp.eq.s32.totalorder %s16, 1
    %p207 = scmp.ne.s32.totalorder %s202, %s204
    %p208 = scmp.eq.s32.totalorder %s16, 0
    %p209 = por %p207, %p208
    %p210 = scmp.ne.s32.totalorder %s202, %s204
    %p211 = scmp.eq.s32.totalorder %s21, 1
    %p212 = por %p210, %p211
    %p213 = scmp.ne.s32.totalorder %s204, %s205
    %p214 = scmp.eq.s32.totalorder %s21, 0
    %p215 = por %p213, %p214
    %p216 = scmp.ne.s32.totalorder %s204, %s205
    %p217 = scmp.eq.s32.totalorder %s22, 1
    %p218 = por %p216, %p217
    %p220 = scmp.ne.s32.totalorder %s205, %s219
    %p221 = scmp.eq.s32.totalorder %s22, 0
    %p222 = por %p220, %p221
    %s224 = sadd.s32 %s223, 1
    %p227 = scmp.eq.s32.totalorder %s16, 1
    %p228 = scmp.ne.s32.totalorder %s223, %s225
    %p229 = scmp.eq.s32.totalorder %s16, 0
    %p230 = por %p228, %p229
    %p231 = scmp.ne.s32.totalorder %s223, %s225
    %p232 = scmp.eq.s32.totalorder %s21, 1
    %p233 = por %p231, %p232
    %p234 = scmp.ne.s32.totalorder %s225, %s226
    %p235 = scmp.eq.s32.totalorder %s21, 0
    %p236 = por %p234, %p235
    %p237 = scmp.ne.s32.totalorder %s225, %s226
    %p238 = scmp.eq.s32.totalorder %s22, 1
    %p239 = por %p237, %p238
    %p241 = scmp.ne.s32.totalorder %s226, %s240
    %p242 = scmp.eq.s32.totalorder %s22, 0
    %p243 = por %p241, %p242
    %s244 = ssub.s32 %s16, %s23
    %p245 = scmp.eq.s32.totalorder %s244, 0
    %s247 = sadd.s32 %s246, 1
    %s248 = scalar_select %p245, %s246, %s247
    %p251 = pneg %p245
    %p252 = scmp.eq.s32.totalorder %s16, 1
    %p253 = por %p251, %p252
    %p254 = scmp.ne.s32.totalorder %s246, %s249
    %p255 = scmp.eq.s32.totalorder %s16, 0
    %p256 = por %p254, %p255
    %p257 = scmp.ne.s32.totalorder %s246, %s249
    %p258 = scmp.eq.s32.totalorder %s21, 1
    %p259 = por %p257, %p258
    %p260 = scmp.ne.s32.totalorder %s249, %s250
    %p261 = scmp.eq.s32.totalorder %s21, 0
    %p262 = por %p260, %p261
    %p263 = scmp.ne.s32.totalorder %s249, %s250
    %p264 = scmp.eq.s32.totalorder %s22, 1
    %p265 = por %p263, %p264
    %p267 = scmp.ne.s32.totalorder %s250, %s266
    %p268 = scmp.eq.s32.totalorder %s22, 0
    %p269 = por %p267, %p268
    %p270 = scmp.le.s32.totalorder 1, %s16
    %p271 = scmp.lt.s32.totalorder %s16, 3
    %p272 = pnand %p270, %p271
    %p273 = pneg %p272
    // Predicated region
    $region9: #{_lambda_.2} parent=5 // pred_check
      _
    $region10: #{_lambda_.2} parent=5 // pred_check_branch
      %275 = sbr.rel (%p272) target = $region12
    $region11: #{_lambda_.2} parent=5 // pred_region
      %s276 = ssub.s32 %s16, 1
      // Predicated region
      $region13: #{_lambda_.2} parent=11 // pred_check
        %p277 = pneg %p89
      $region14: #{_lambda_.2} parent=11 // pred_check_branch
        %279 = sbr.rel (%p277) target = $region16
      $region15: #{_lambda_.2} parent=11 // pred_region
        _
      $region16: #{_lambda_.2} parent=11 // pred_fallthru
        _
      // Predicated region
      $region17: #{_lambda_.2} parent=11 // pred_check
        %p280 = pneg %p110
      $region18: #{_lambda_.2} parent=11 // pred_check_branch
        %282 = sbr.rel (%p280) target = $region20
      $region19: #{_lambda_.2} parent=11 // pred_region
        _
      $region20: #{_lambda_.2} parent=11 // pred_fallthru
        _
      // Predicated region
      $region21: #{_lambda_.2} parent=11 // pred_check
        %p283 = pneg %p131
      $region22: #{_lambda_.2} parent=11 // pred_check_branch
        %285 = sbr.rel (%p283) target = $region24
      $region23: #{_lambda_.2} parent=11 // pred_region
        _
      $region24: #{_lambda_.2} parent=11 // pred_fallthru
        _
      // Predicated region
      $region25: #{_lambda_.2} parent=11 // pred_check
        %p286 = pneg %p152
      $region26: #{_lambda_.2} parent=11 // pred_check_branch
        %288 = sbr.rel (%p286) target = $region28
      $region27: #{_lambda_.2} parent=11 // pred_region
        _
      $region28: #{_lambda_.2} parent=11 // pred_fallthru
        _
      // Predicated region
      $region29: #{_lambda_.2} parent=11 // pred_check
        %p289 = pneg %p173
      $region30: #{_lambda_.2} parent=11 // pred_check_branch
        %291 = sbr.rel (%p289) target = $region32
      $region31: #{_lambda_.2} parent=11 // pred_region
        _
      $region32: #{_lambda_.2} parent=11 // pred_fallthru
        _
      // Predicated region
      $region33: #{_lambda_.2} parent=11 // pred_check
        %p292 = pneg %p194
      $region34: #{_lambda_.2} parent=11 // pred_check_branch
        %294 = sbr.rel (%p292) target = $region36
      $region35: #{_lambda_.2} parent=11 // pred_region
        _
      $region36: #{_lambda_.2} parent=11 // pred_fallthru
        _
      // Predicated region
      $region37: #{_lambda_.2} parent=11 // pred_check
        %p295 = pneg %p215
      $region38: #{_lambda_.2} parent=11 // pred_check_branch
        %297 = sbr.rel (%p295) target = $region40
      $region39: #{_lambda_.2} parent=11 // pred_region
        _
      $region40: #{_lambda_.2} parent=11 // pred_fallthru
        _
      // Predicated region
      $region41: #{_lambda_.2} parent=11 // pred_check
        %p298 = pneg %p236
      $region42: #{_lambda_.2} parent=11 // pred_check_branch
        %300 = sbr.rel (%p298) target = $region44
      $region43: #{_lambda_.2} parent=11 // pred_region
        _
      $region44: #{_lambda_.2} parent=11 // pred_fallthru
        _
    $region12: #{_lambda_.2} parent=5 // pred_fallthru
      _
    %p301 = scmp.lt.s32.totalorder %s16, 2
    // Predicated region
    $region45: #{_lambda_.2} parent=5 // pred_check
      %p302 = pneg %p301
    $region46: #{_lambda_.2} parent=5 // pred_check_branch
      %304 = sbr.rel (%p302) target = $region48
    $region47: #{_lambda_.2} parent=5 // pred_region
      // Predicated region
      $region49: #{_lambda_.2} parent=47 // pred_check
        %p305 = pneg %p36
      $region50: #{_lambda_.2} parent=47 // pred_check_branch
        %307 = sbr.rel (%p305) target = $region52
      $region51: #{_lambda_.2} parent=47 // pred_region
        %p308 = scmp.lt.s32.totalorder %s16, 1
        %s309 = scalar_select %p308, %s16, 1
        %s310 = smul.addr %s309, 4
        %s311 = smul.addr %s310, 8
        %s312 = scalar_lea.vmem %s0, %s311
      $region52: #{_lambda_.2} parent=47 // pred_fallthru
        _
      // Predicated region
      $region53: #{_lambda_.2} parent=47 // pred_check
        %p313 = pneg %p62
      $region54: #{_lambda_.2} parent=47 // pred_check_branch
        %315 = sbr.rel (%p313) target = $region56
      $region55: #{_lambda_.2} parent=47 // pred_region
        %p316 = scmp.lt.s32.totalorder %s16, 1
        %s317 = scalar_select %p316, %s16, 1
        %s318 = smul.addr %s317, 4
        %s319 = smul.addr %s318, 8
        %s320 = scalar_lea.vmem %s1, %s319
      $region56: #{_lambda_.2} parent=47 // pred_fallthru
        _
    $region48: #{_lambda_.2} parent=5 // pred_fallthru
      _
    %p321 = scmp.le.s32.totalorder 1, %s16
    %p322 = scmp.lt.s32.totalorder %s16, 3
    %p323 = pnand %p321, %p322
    %p324 = pneg %p323
    // Predicated region
    $region57: #{_lambda_.2} parent=5 // pred_check
      _
    $region58: #{_lambda_.2} parent=5 // pred_check_branch
      %326 = sbr.rel (%p323) target = $region60
    $region59: #{_lambda_.2} parent=5 // pred_region
      %s327 = ssub.s32 %s16, 1
      %p328 = scmp.lt.s32.totalorder %s21, 1
      %s329 = scalar_select %p328, %s21, 1
      %s330 = smul.addr %s329, 4
      %s331 = smul.addr %s330, 8
      %s332 = scalar_lea.vmem %s0, %s331
      %p333 = pneg %p42
      %p334 = pneg %p39
      %p335 = scmp.lt.s32.totalorder %s21, 1
      %s336 = scalar_select %p335, %s21, 1
      %s337 = smul.addr %s336, 4
      %s338 = smul.addr %s337, 8
      %s339 = scalar_lea.vmem %s1, %s338
      %p340 = pneg %p68
      %p341 = pneg %p65
      %p342 = pneg %p89
      %p343 = pneg %p86
      %p344 = pneg %p110
      %p345 = pneg %p107
      %p346 = pneg %p131
      %p347 = pneg %p128
      %p348 = pneg %p152
      %p349 = pneg %p149
      %p350 = pneg %p173
      %p351 = pneg %p170
      %p352 = pneg %p194
      %p353 = pneg %p191
      %p354 = pneg %p215
      %p355 = pneg %p212
      %p356 = pneg %p236
      %p357 = pneg %p233
      %p358 = pneg %p262
      %p359 = pneg %p259
      %p360 = scmp.lt.s32.totalorder %s21, 1
      %s361 = scalar_select %p360, %s21, 1
      %s362 = smul.addr %s361, 4
      %s363 = smul.addr %s362, 8
      %s364 = scalar_lea.vmem %s10, %s363
      %p365 = scmp.lt.s32.totalorder %s21, 1
      %s366 = scalar_select %p365, %s21, 1
      %s367 = smul.addr %s366, 4
      %s368 = smul.addr %s367, 8
      %s369 = scalar_lea.vmem %s0, %s368
      %p370 = scmp.lt.s32.totalorder %s21, 1
      %s371 = scalar_select %p370, %s21, 1
      %s372 = smul.addr %s371, 4
      %s373 = smul.addr %s372, 8
      %s374 = scalar_lea.vmem %s1, %s373
      %p375 = scmp.lt.s32.totalorder %s21, 1
      %s376 = scalar_select %p375, %s21, 1
      %s377 = smul.addr %s376, 4
      %s378 = smul.addr %s377, 8
      %s379 = scalar_lea.vmem %s10, %s378
      %v381 = vld [vmem:[%s374] sm:$0xff]
      %v382 = vld [vmem:[%s374 + $0x8] sm:$0xff]
      %v383 = vld [vmem:[%s374 + $0x10] sm:$0xff]
      %v384 = vld [vmem:[%s374 + $0x18] sm:$0xff]
      %v385 = vld [vmem:[%s369] sm:$0xff]
      %v386 = vld [vmem:[%s369 + $0x8] sm:$0xff]
      %v387 = vld [vmem:[%s369 + $0x10] sm:$0xff]
      %v388 = vld [vmem:[%s369 + $0x18] sm:$0xff]
      %v389 = vpack.c.bf16 %v386, %v385
      %v390 = vpack.c.bf16 %v388, %v387
      %v391 = vld [vmem:[%s2] sm:$0xf]
      %v392 = vld [vmem:[%s3] sm:$0x1]
      %v394 = vlaneseq
      %v395 = vshrl.u32 %v394, 7
      %v396 = vsub.s32 0, %v395
      %v397 = vrot.slane %v392, %v396
      %vm399 = vcmask 64512
      %v401 = vsel %vm399, %v389, 0
      %v404 = vsel %vm399, %v390, 0
      %vm406 = vcmask 1043456
      %v408 = vsel %vm406, %v391, 0
      %410 = vmatprep.subr.bf16.mxu0 0
      %411 = vmatpush1.bf16.msra.mxu0 0
      %412 = vmatprep.subr.bf16.mxu0 0
      %413 = vmatpush1.bf16.msra.mxu0 0
      %414 = vmatprep.subr.bf16.mxu0 0
      %415 = vmatpush1.bf16.msra.mxu0 0
      %416 = vmatprep.subr.bf16.mxu0 0
      %417 = vmatpush1.bf16.msra.mxu0 0
      %418 = vmatprep.subr.bf16.mxu0 0
      %419 = vmatpush1.bf16.msra.mxu0 0
      %420 = vmatprep.subr.bf16.mxu0 0
      %421 = vmatpush1.bf16.msra.mxu0 0
      %422 = vmatprep.subr.bf16.mxu0 0
      %423 = vmatpush1.bf16.msra.mxu0 0
      %424 = vmatprep.subr.bf16.mxu0 0
      %425 = vmatpush1.bf16.msra.mxu0 %v408
      %426 = vmatprep.subr.bf16.mxu0 0
      %427 = vmatpush2.bf16.msra.mxu0 0
      %428 = vmatprep.subr.bf16.mxu0 0
      %429 = vmatpush2.bf16.msra.mxu0 0
      %430 = vmatprep.subr.bf16.mxu0 0
      %431 = vmatpush2.bf16.msra.mxu0 0
      %432 = vmatprep.subr.bf16.mxu0 0
      %433 = vmatpush2.bf16.msra.mxu0 0
      %434 = vmatprep.subr.bf16.mxu0 0
      %435 = vmatpush2.bf16.msra.mxu0 0
      %436 = vmatprep.subr.bf16.mxu0 0
      %437 = vmatpush2.bf16.msra.mxu0 0
      %438 = vmatprep.subr.bf16.mxu0 0
      %439 = vmatpush2.bf16.msra.mxu0 0
      %440 = vmatprep.subr.bf16.mxu0 0
      %441 = vmatpush2.bf16.msra.mxu0 0
      %442 = vmatprep.mubr.bf16.mxu0 0
      %443 = vmatmul.mubr.bf16.gmra.mxu0 %v401
      %v444 = vpop.f32.mrf.mxu0
      %v445 = vadd.f32 %v397, %v444
      %v446 = vpop.f32.mrf.mxu0
      %v447 = vpop.f32.mrf.mxu0
      %v448 = vadd.f32 %v397, %v447
      %v449 = vpop.f32.mrf.mxu0
      %450 = vmatprep.mubr.bf16.mxu0 0
      %451 = vmatmul.mubr.bf16.gmra.mxu0 %v404
      %v452 = vpop.f32.mrf.mxu0
      %v453 = vadd.f32 %v397, %v452
      %v454 = vpop.f32.mrf.mxu0
      %v455 = vpop.f32.mrf.mxu0
      %v456 = vadd.f32 %v397, %v455
      %v457 = vpop.f32.mrf.mxu0
      %458 = vdwg.mxu0
      %460 = vset.pattern.permute.xlu0 0
      %461 = vperm.xlu0 %460, %v381
      %v462 = vpop.permute.xlu0 %461
      %465 = vset.pattern.permute.xlu0 0
      %466 = vperm.xlu0 %465, %v382
      %v467 = vpop.permute.xlu0 %466
      %470 = vset.pattern.permute.xlu0 0
      %471 = vperm.xlu0 %470, %v383
      %v472 = vpop.permute.xlu0 %471
      %475 = vset.pattern.permute.xlu0 0
      %476 = vperm.xlu0 %475, %v384
      %v477 = vpop.permute.xlu0 %476
      %v479 = vmul.f32 %v445, %v462
      %v480 = vmul.f32 %v448, %v467
      %v481 = vmul.f32 %v453, %v472
      %v482 = vmul.f32 %v456, %v477
      %v483 = vpack.c.bf16 %v480, %v479
      %v484 = vpack.c.bf16 %v482, %v481
      %v485 = vld [vmem:[%s4] sm:$0xf]
      %v486 = vld [vmem:[%s4 + $0x4] sm:$0xf]
      %v489 = vunpack.c.l.b16 %v485
      %v490 = vunpack.c.l.b16 %v486
      %v491 = vpack.c.b16 %v490, %v489
      %vm493 = vcmask 130048
      %v495 = vsel %vm493, %v483, 0
      %v498 = vsel %vm493, %v484, 0
      %500 = vmatprep.subr.bf16.mxu0 0
      %501 = vmatpush1.bf16.msra.mxu0 0
      %502 = vmatprep.subr.bf16.mxu0 0
      %503 = vmatpush1.bf16.msra.mxu0 0
      %504 = vmatprep.subr.bf16.mxu0 0
      %505 = vmatpush1.bf16.msra.mxu0 0
      %506 = vmatprep.subr.bf16.mxu0 0
      %507 = vmatpush1.bf16.msra.mxu0 0
      %508 = vmatprep.subr.bf16.mxu0 0
      %509 = vmatpush1.bf16.msra.mxu0 0
      %510 = vmatprep.subr.bf16.mxu0 0
      %511 = vmatpush1.bf16.msra.mxu0 0
      %512 = vmatprep.subr.bf16.mxu0 0
      %513 = vmatpush1.bf16.msra.mxu0 0
      %514 = vmatprep.subr.bf16.mxu0 0
      %515 = vmatpush1.bf16.msra.mxu0 %v491
      %516 = vmatprep.subr.bf16.mxu0 0
      %517 = vmatpush2.bf16.msra.mxu0 0
      %518 = vmatprep.subr.bf16.mxu0 0
      %519 = vmatpush2.bf16.msra.mxu0 0
      %520 = vmatprep.subr.bf16.mxu0 0
      %521 = vmatpush2.bf16.msra.mxu0 0
      %522 = vmatprep.subr.bf16.mxu0 0
      %523 = vmatpush2.bf16.msra.mxu0 0
      %524 = vmatprep.subr.bf16.mxu0 0
      %525 = vmatpush2.bf16.msra.mxu0 0
      %526 = vmatprep.subr.bf16.mxu0 0
      %527 = vmatpush2.bf16.msra.mxu0 0
      %528 = vmatprep.subr.bf16.mxu0 0
      %529 = vmatpush2.bf16.msra.mxu0 0
      %530 = vmatprep.subr.bf16.mxu0 0
      %531 = vmatpush2.bf16.msra.mxu0 0
      %532 = vmatprep.mubr.bf16.mxu0 0
      %533 = vmatmul.mubr.bf16.gmra.mxu0 %v495
      %v534 = vpop.f32.mrf.mxu0
      %v535 = vadd.f32 0.0, %v534
      %v536 = vpop.f32.mrf.mxu0
      %v537 = vpop.f32.mrf.mxu0
      %v538 = vadd.f32 0.0, %v537
      %v539 = vpop.f32.mrf.mxu0
      %540 = vmatprep.mubr.bf16.mxu0 0
      %541 = vmatmul.mubr.bf16.gmra.mxu0 %v498
      %v542 = vpop.f32.mrf.mxu0
      %v543 = vadd.f32 0.0, %v542
      %v544 = vpop.f32.mrf.mxu0
      %v545 = vpop.f32.mrf.mxu0
      %v546 = vadd.f32 0.0, %v545
      %v547 = vpop.f32.mrf.mxu0
      %548 = vdwg.mxu0
      %vm553 = vcmask 1040384
      %v554 = vrot.slane %v535, 7
      %v555 = vrot.slane %v538, 7
      %v556 = vsel %vm553, %v554, %v555
      %v557 = vrot.slane %v543, 7
      %v558 = vsel %vm553, %v555, %v557
      %v559 = vrot.slane %v546, 7
      %v560 = vsel %vm553, %v557, %v559
      %v562 = vsel %vm553, 0.0, %v554
      %564 = vrot.lane.b32.xlu0 %v562, 16
      %v565 = vpop.permute.xlu0 %564
      %566 = vrot.lane.b32.xlu0 %v556, 16
      %v567 = vpop.permute.xlu0 %566
      %568 = vrot.lane.b32.xlu0 %v558, 16
      %v569 = vpop.permute.xlu0 %568
      %570 = vrot.lane.b32.xlu0 %v560, 16
      %v571 = vpop.permute.xlu0 %570
      %v576 = vadd.f32 %v535, %v565
      %v577 = vadd.f32 %v538, %v567
      %v578 = vadd.f32 %v543, %v569
      %v579 = vadd.f32 %v546, %v571
      %vm580 = vcmask 1046528
      %v581 = vrot.slane %v535, 1
      %v582 = vrot.slane %v538, 1
      %v583 = vsel %vm580, %v581, %v582
      %v584 = vrot.slane %v543, 1
      %v585 = vsel %vm580, %v582, %v584
      %v586 = vrot.slane %v546, 1
      %v587 = vsel %vm580, %v584, %v586
      %v589 = vsel %vm580, %v586, 0.0
      %591 = vrot.lane.b32.xlu0 %v583, 112
      %v592 = vpop.permute.xlu0 %591
      %593 = vrot.lane.b32.xlu0 %v585, 112
      %v594 = vpop.permute.xlu0 %593
      %595 = vrot.lane.b32.xlu0 %v587, 112
      %v596 = vpop.permute.xlu0 %595
      %597 = vrot.lane.b32.xlu0 %v589, 112
      %v598 = vpop.permute.xlu0 %597
      %v603 = vadd.f32 %v576, %v592
      %v604 = vadd.f32 %v577, %v594
      %v605 = vadd.f32 %v578, %v596
      %v606 = vadd.f32 %v579, %v598
      %v607 = vld [vmem:[%s5] sm:$0x1]
      %v609 = vlaneseq
      %v610 = vshrl.u32 %v609, 7
      %v611 = vsub.s32 0, %v610
      %v612 = vrot.slane %v607, %v611
      %613 = vrot.lane.b32.xlu0 %v612, 16
      %v614 = vpop.permute.xlu0 %613
      %v616 = vadd.f32 %v603, %v614
      %v617 = vadd.f32 %v604, %v614
      %v618 = vadd.f32 %v605, %v614
      %v619 = vadd.f32 %v606, %v614
      %v620 = vmax.f32 %v616, 0.0
      %v621 = vmax.f32 %v617, 0.0
      %v622 = vmax.f32 %v618, 0.0
      %v623 = vmax.f32 %v619, 0.0
      %v624 = vpack.c.bf16 %v621, %v620
      %v625 = vpack.c.bf16 %v623, %v622
      %v626 = vld [vmem:[%s6] sm:$0xf]
      %v627 = vld [vmem:[%s6 + $0x4] sm:$0xf]
      %v628 = vld [vmem:[%s7] sm:$0x1]
      %v630 = vlaneseq
      %v631 = vshrl.u32 %v630, 7
      %v632 = vsub.s32 0, %v631
      %v633 = vrot.slane %v628, %v632
      %637 = vrot.lane.b32.xlu0 %v624, 112
      %v638 = vpop.permute.xlu0 %637
      %639 = vrot.lane.b32.xlu0 %v625, 112
      %v640 = vpop.permute.xlu0 %639
      %v643 = vunpack.c.l.b16 %v626
      %v644 = vunpack.c.l.b16 %v627
      %v645 = vpack.c.b16 %v644, %v643
      %v648 = vsel %vm493, %v638, 0
      %v651 = vsel %vm493, %v640, 0
      %653 = vmatprep.subr.bf16.mxu0 0
      %654 = vmatpush1.bf16.msra.mxu0 0
      %655 = vmatprep.subr.bf16.mxu0 0
      %656 = vmatpush1.bf16.msra.mxu0 0
      %657 = vmatprep.subr.bf16.mxu0 0
      %658 = vmatpush1.bf16.msra.mxu0 0
      %659 = vmatprep.subr.bf16.mxu0 0
      %660 = vmatpush1.bf16.msra.mxu0 0
      %661 = vmatprep.subr.bf16.mxu0 0
      %662 = vmatpush1.bf16.msra.mxu0 0
      %663 = vmatprep.subr.bf16.mxu0 0
      %664 = vmatpush1.bf16.msra.mxu0 0
      %665 = vmatprep.subr.bf16.mxu0 0
      %666 = vmatpush1.bf16.msra.mxu0 0
      %667 = vmatprep.subr.bf16.mxu0 0
      %668 = vmatpush1.bf16.msra.mxu0 %v645
      %669 = vmatprep.subr.bf16.mxu0 0
      %670 = vmatpush2.bf16.msra.mxu0 0
      %671 = vmatprep.subr.bf16.mxu0 0
      %672 = vmatpush2.bf16.msra.mxu0 0
      %673 = vmatprep.subr.bf16.mxu0 0
      %674 = vmatpush2.bf16.msra.mxu0 0
      %675 = vmatprep.subr.bf16.mxu0 0
      %676 = vmatpush2.bf16.msra.mxu0 0
      %677 = vmatprep.subr.bf16.mxu0 0
      %678 = vmatpush2.bf16.msra.mxu0 0
      %679 = vmatprep.subr.bf16.mxu0 0
      %680 = vmatpush2.bf16.msra.mxu0 0
      %681 = vmatprep.subr.bf16.mxu0 0
      %682 = vmatpush2.bf16.msra.mxu0 0
      %683 = vmatprep.subr.bf16.mxu0 0
      %684 = vmatpush2.bf16.msra.mxu0 0
      %685 = vmatprep.mubr.bf16.mxu0 0
      %686 = vmatmul.mubr.bf16.gmra.mxu0 %v648
      %v687 = vpop.f32.mrf.mxu0
      %v688 = vadd.f32 %v633, %v687
      %v689 = vpop.f32.mrf.mxu0
      %v690 = vpop.f32.mrf.mxu0
      %v691 = vadd.f32 %v633, %v690
      %v692 = vpop.f32.mrf.mxu0
      %693 = vmatprep.mubr.bf16.mxu0 0
      %694 = vmatmul.mubr.bf16.gmra.mxu0 %v651
      %v695 = vpop.f32.mrf.mxu0
      %v696 = vadd.f32 %v633, %v695
      %v697 = vpop.f32.mrf.mxu0
      %v698 = vpop.f32.mrf.mxu0
      %v699 = vadd.f32 %v633, %v698
      %v700 = vpop.f32.mrf.mxu0
      %701 = vdwg.mxu0
      %v702 = vadd.f32 %v479, %v688
      %v703 = vadd.f32 %v480, %v691
      %v704 = vadd.f32 %v481, %v696
      %v705 = vadd.f32 %v482, %v699
      %v706 = vmul.f32 %v702, %v462
      %v707 = vmul.f32 %v703, %v467
      %v708 = vmul.f32 %v704, %v472
      %v709 = vmul.f32 %v705, %v477
      %v710 = vpack.c.bf16 %v707, %v706
      %v711 = vpack.c.bf16 %v709, %v708
      %s712 = scalar_lea.vmem %s4, 8
      %v713 = vld [vmem:[%s712] sm:$0xf]
      %v714 = vld [vmem:[%s712 + $0x4] sm:$0xf]
      %v717 = vunpack.c.l.b16 %v713
      %v718 = vunpack.c.l.b16 %v714
      %v719 = vpack.c.b16 %v718, %v717
      %v722 = vsel %vm493, %v710, 0
      %v725 = vsel %vm493, %v711, 0
      %727 = vmatprep.subr.bf16.mxu0 0
      %728 = vmatpush1.bf16.msra.mxu0 0
      %729 = vmatprep.subr.bf16.mxu0 0
      %730 = vmatpush1.bf16.msra.mxu0 0
      %731 = vmatprep.subr.bf16.mxu0 0
      %732 = vmatpush1.bf16.msra.mxu0 0
      %733 = vmatprep.subr.bf16.mxu0 0
      %734 = vmatpush1.bf16.msra.mxu0 0
      %735 = vmatprep.subr.bf16.mxu0 0
      %736 = vmatpush1.bf16.msra.mxu0 0
      %737 = vmatprep.subr.bf16.mxu0 0
      %738 = vmatpush1.bf16.msra.mxu0 0
      %739 = vmatprep.subr.bf16.mxu0 0
      %740 = vmatpush1.bf16.msra.mxu0 0
      %741 = vmatprep.subr.bf16.mxu0 0
      %742 = vmatpush1.bf16.msra.mxu0 %v719
      %743 = vmatprep.subr.bf16.mxu0 0
      %744 = vmatpush2.bf16.msra.mxu0 0
      %745 = vmatprep.subr.bf16.mxu0 0
      %746 = vmatpush2.bf16.msra.mxu0 0
      %747 = vmatprep.subr.bf16.mxu0 0
      %748 = vmatpush2.bf16.msra.mxu0 0
      %749 = vmatprep.subr.bf16.mxu0 0
      %750 = vmatpush2.bf16.msra.mxu0 0
      %751 = vmatprep.subr.bf16.mxu0 0
      %752 = vmatpush2.bf16.msra.mxu0 0
      %753 = vmatprep.subr.bf16.mxu0 0
      %754 = vmatpush2.bf16.msra.mxu0 0
      %755 = vmatprep.subr.bf16.mxu0 0
      %756 = vmatpush2.bf16.msra.mxu0 0
      %757 = vmatprep.subr.bf16.mxu0 0
      %758 = vmatpush2.bf16.msra.mxu0 0
      %759 = vmatprep.mubr.bf16.mxu0 0
      %760 = vmatmul.mubr.bf16.gmra.mxu0 %v722
      %v761 = vpop.f32.mrf.mxu0
      %v762 = vadd.f32 0.0, %v761
      %v763 = vpop.f32.mrf.mxu0
      %v764 = vpop.f32.mrf.mxu0
      %v765 = vadd.f32 0.0, %v764
      %v766 = vpop.f32.mrf.mxu0
      %767 = vmatprep.mubr.bf16.mxu0 0
      %768 = vmatmul.mubr.bf16.gmra.mxu0 %v725
      %v769 = vpop.f32.mrf.mxu0
      %v770 = vadd.f32 0.0, %v769
      %v771 = vpop.f32.mrf.mxu0
      %v772 = vpop.f32.mrf.mxu0
      %v773 = vadd.f32 0.0, %v772
      %v774 = vpop.f32.mrf.mxu0
      %775 = vdwg.mxu0
      %vm780 = vcmask 1041408
      %v781 = vrot.slane %v762, 6
      %v782 = vrot.slane %v765, 6
      %v783 = vsel %vm780, %v781, %v782
      %v784 = vrot.slane %v770, 6
      %v785 = vsel %vm780, %v782, %v784
      %v786 = vrot.slane %v773, 6
      %v787 = vsel %vm780, %v784, %v786
      %v789 = vsel %vm780, 0.0, %v781
      %791 = vrot.lane.b32.xlu0 %v789, 16
      %v792 = vpop.permute.xlu0 %791
      %793 = vrot.lane.b32.xlu0 %v783, 16
      %v794 = vpop.permute.xlu0 %793
      %795 = vrot.lane.b32.xlu0 %v785, 16
      %v796 = vpop.permute.xlu0 %795
      %797 = vrot.lane.b32.xlu0 %v787, 16
      %v798 = vpop.permute.xlu0 %797
      %v803 = vadd.f32 %v762, %v792
      %v804 = vadd.f32 %v765, %v794
      %v805 = vadd.f32 %v770, %v796
      %v806 = vadd.f32 %v773, %v798
      %vm807 = vcmask 1045504
      %v808 = vrot.slane %v762, 2
      %v809 = vrot.slane %v765, 2
      %v810 = vsel %vm807, %v808, %v809
      %v811 = vrot.slane %v770, 2
      %v812 = vsel %vm807, %v809, %v811
      %v813 = vrot.slane %v773, 2
      %v814 = vsel %vm807, %v811, %v813
      %v816 = vsel %vm807, %v813, 0.0
      %818 = vrot.lane.b32.xlu0 %v810, 112
      %v819 = vpop.permute.xlu0 %818
      %820 = vrot.lane.b32.xlu0 %v812, 112
      %v821 = vpop.permute.xlu0 %820
      %822 = vrot.lane.b32.xlu0 %v814, 112
      %v823 = vpop.permute.xlu0 %822
      %824 = vrot.lane.b32.xlu0 %v816, 112
      %v825 = vpop.permute.xlu0 %824
      %v830 = vadd.f32 %v803, %v819
      %v831 = vadd.f32 %v804, %v821
      %v832 = vadd.f32 %v805, %v823
      %v833 = vadd.f32 %v806, %v825
      %s834 = scalar_lea.vmem %s5, 1
      %v835 = vld [vmem:[%s834] sm:$0x1]
      %v837 = vlaneseq
      %v838 = vshrl.u32 %v837, 7
      %v839 = vsub.s32 0, %v838
      %v840 = vrot.slane %v835, %v839
      %841 = vrot.lane.b32.xlu0 %v840, 16
      %v842 = vpop.permute.xlu0 %841
      %v844 = vadd.f32 %v830, %v842
      %v845 = vadd.f32 %v831, %v842
      %v846 = vadd.f32 %v832, %v842
      %v847 = vadd.f32 %v833, %v842
      %v848 = vmax.f32 %v844, 0.0
      %v849 = vmax.f32 %v845, 0.0
      %v850 = vmax.f32 %v846, 0.0
      %v851 = vmax.f32 %v847, 0.0
      %v852 = vpack.c.bf16 %v849, %v848
      %v853 = vpack.c.bf16 %v851, %v850
      %s854 = scalar_lea.vmem %s6, 8
      %v855 = vld [vmem:[%s854] sm:$0xf]
      %v856 = vld [vmem:[%s854 + $0x4] sm:$0xf]
      %s857 = scalar_lea.vmem %s7, 1
      %v858 = vld [vmem:[%s857] sm:$0x1]
      %v860 = vlaneseq
      %v861 = vshrl.u32 %v860, 7
      %v862 = vsub.s32 0, %v861
      %v863 = vrot.slane %v858, %v862
      %867 = vrot.lane.b32.xlu0 %v852, 112
      %v868 = vpop.permute.xlu0 %867
      %869 = vrot.lane.b32.xlu0 %v853, 112
      %v870 = vpop.permute.xlu0 %869
      %v873 = vunpack.c.l.b16 %v855
      %v874 = vunpack.c.l.b16 %v856
      %v875 = vpack.c.b16 %v874, %v873
      %v878 = vsel %vm493, %v868, 0
      %v881 = vsel %vm493, %v870, 0
      %883 = vmatprep.subr.bf16.mxu0 0
      %884 = vmatpush1.bf16.msra.mxu0 0
      %885 = vmatprep.subr.bf16.mxu0 0
      %886 = vmatpush1.bf16.msra.mxu0 0
      %887 = vmatprep.subr.bf16.mxu0 0
      %888 = vmatpush1.bf16.msra.mxu0 0
      %889 = vmatprep.subr.bf16.mxu0 0
      %890 = vmatpush1.bf16.msra.mxu0 0
      %891 = vmatprep.subr.bf16.mxu0 0
      %892 = vmatpush1.bf16.msra.mxu0 0
      %893 = vmatprep.subr.bf16.mxu0 0
      %894 = vmatpush1.bf16.msra.mxu0 0
      %895 = vmatprep.subr.bf16.mxu0 0
      %896 = vmatpush1.bf16.msra.mxu0 0
      %897 = vmatprep.subr.bf16.mxu0 0
      %898 = vmatpush1.bf16.msra.mxu0 %v875
      %899 = vmatprep.subr.bf16.mxu0 0
      %900 = vmatpush2.bf16.msra.mxu0 0
      %901 = vmatprep.subr.bf16.mxu0 0
      %902 = vmatpush2.bf16.msra.mxu0 0
      %903 = vmatprep.subr.bf16.mxu0 0
      %904 = vmatpush2.bf16.msra.mxu0 0
      %905 = vmatprep.subr.bf16.mxu0 0
      %906 = vmatpush2.bf16.msra.mxu0 0
      %907 = vmatprep.subr.bf16.mxu0 0
      %908 = vmatpush2.bf16.msra.mxu0 0
      %909 = vmatprep.subr.bf16.mxu0 0
      %910 = vmatpush2.bf16.msra.mxu0 0
      %911 = vmatprep.subr.bf16.mxu0 0
      %912 = vmatpush2.bf16.msra.mxu0 0
      %913 = vmatprep.subr.bf16.mxu0 0
      %914 = vmatpush2.bf16.msra.mxu0 0
      %915 = vmatprep.mubr.bf16.mxu0 0
      %916 = vmatmul.mubr.bf16.gmra.mxu0 %v878
      %v917 = vpop.f32.mrf.mxu0
      %v918 = vadd.f32 %v863, %v917
      %v919 = vpop.f32.mrf.mxu0
      %v920 = vpop.f32.mrf.mxu0
      %v921 = vadd.f32 %v863, %v920
      %v922 = vpop.f32.mrf.mxu0
      %923 = vmatprep.mubr.bf16.mxu0 0
      %924 = vmatmul.mubr.bf16.gmra.mxu0 %v881
      %v925 = vpop.f32.mrf.mxu0
      %v926 = vadd.f32 %v863, %v925
      %v927 = vpop.f32.mrf.mxu0
      %v928 = vpop.f32.mrf.mxu0
      %v929 = vadd.f32 %v863, %v928
      %v930 = vpop.f32.mrf.mxu0
      %931 = vdwg.mxu0
      %v932 = vadd.f32 %v706, %v918
      %v933 = vadd.f32 %v707, %v921
      %v934 = vadd.f32 %v708, %v926
      %v935 = vadd.f32 %v709, %v929
      %v936 = vmul.f32 %v932, %v462
      %v937 = vmul.f32 %v933, %v467
      %v938 = vmul.f32 %v934, %v472
      %v939 = vmul.f32 %v935, %v477
      %v940 = vpack.c.bf16 %v937, %v936
      %v941 = vpack.c.bf16 %v939, %v938
      %s942 = scalar_lea.vmem %s4, 16
      %v943 = vld [vmem:[%s942] sm:$0xf]
      %v944 = vld [vmem:[%s942 + $0x4] sm:$0xf]
      %v947 = vunpack.c.l.b16 %v943
      %v948 = vunpack.c.l.b16 %v944
      %v949 = vpack.c.b16 %v948, %v947
      %v952 = vsel %vm493, %v940, 0
      %v955 = vsel %vm493, %v941, 0
      %957 = vmatprep.subr.bf16.mxu0 0
      %958 = vmatpush1.bf16.msra.mxu0 0
      %959 = vmatprep.subr.bf16.mxu0 0
      %960 = vmatpush1.bf16.msra.mxu0 0
      %961 = vmatprep.subr.bf16.mxu0 0
      %962 = vmatpush1.bf16.msra.mxu0 0
      %963 = vmatprep.subr.bf16.mxu0 0
      %964 = vmatpush1.bf16.msra.mxu0 0
      %965 = vmatprep.subr.bf16.mxu0 0
      %966 = vmatpush1.bf16.msra.mxu0 0
      %967 = vmatprep.subr.bf16.mxu0 0
      %968 = vmatpush1.bf16.msra.mxu0 0
      %969 = vmatprep.subr.bf16.mxu0 0
      %970 = vmatpush1.bf16.msra.mxu0 0
      %971 = vmatprep.subr.bf16.mxu0 0
      %972 = vmatpush1.bf16.msra.mxu0 %v949
      %973 = vmatprep.subr.bf16.mxu0 0
      %974 = vmatpush2.bf16.msra.mxu0 0
      %975 = vmatprep.subr.bf16.mxu0 0
      %976 = vmatpush2.bf16.msra.mxu0 0
      %977 = vmatprep.subr.bf16.mxu0 0
      %978 = vmatpush2.bf16.msra.mxu0 0
      %979 = vmatprep.subr.bf16.mxu0 0
      %980 = vmatpush2.bf16.msra.mxu0 0
      %981 = vmatprep.subr.bf16.mxu0 0
      %982 = vmatpush2.bf16.msra.mxu0 0
      %983 = vmatprep.subr.bf16.mxu0 0
      %984 = vmatpush2.bf16.msra.mxu0 0
      %985 = vmatprep.subr.bf16.mxu0 0
      %986 = vmatpush2.bf16.msra.mxu0 0
      %987 = vmatprep.subr.bf16.mxu0 0
      %988 = vmatpush2.bf16.msra.mxu0 0
      %989 = vmatprep.mubr.bf16.mxu0 0
      %990 = vmatmul.mubr.bf16.gmra.mxu0 %v952
      %v991 = vpop.f32.mrf.mxu0
      %v992 = vadd.f32 0.0, %v991
      %v993 = vpop.f32.mrf.mxu0
      %v994 = vpop.f32.mrf.mxu0
      %v995 = vadd.f32 0.0, %v994
      %v996 = vpop.f32.mrf.mxu0
      %997 = vmatprep.mubr.bf16.mxu0 0
      %998 = vmatmul.mubr.bf16.gmra.mxu0 %v955
      %v999 = vpop.f32.mrf.mxu0
      %v1000 = vadd.f32 0.0, %v999
      %v1001 = vpop.f32.mrf.mxu0
      %v1002 = vpop.f32.mrf.mxu0
      %v1003 = vadd.f32 0.0, %v1002
      %v1004 = vpop.f32.mrf.mxu0
      %1005 = vdwg.mxu0
      %v1010 = vrot.slane %v992, 4
      %v1011 = vrot.slane %v995, 4
      %v1012 = vsel %vm406, %v1010, %v1011
      %v1013 = vrot.slane %v1000, 4
      %v1014 = vsel %vm406, %v1011, %v1013
      %v1015 = vrot.slane %v1003, 4
      %v1016 = vsel %vm406, %v1013, %v1015
      %v1018 = vsel %vm406, 0.0, %v1010
      %1020 = vrot.lane.b32.xlu0 %v1018, 16
      %v1021 = vpop.permute.xlu0 %1020
      %1022 = vrot.lane.b32.xlu0 %v1012, 16
      %v1023 = vpop.permute.xlu0 %1022
      %1024 = vrot.lane.b32.xlu0 %v1014, 16
      %v1025 = vpop.permute.xlu0 %1024
      %1026 = vrot.lane.b32.xlu0 %v1016, 16
      %v1027 = vpop.permute.xlu0 %1026
      %v1032 = vadd.f32 %v992, %v1021
      %v1033 = vadd.f32 %v995, %v1023
      %v1034 = vadd.f32 %v1000, %v1025
      %v1035 = vadd.f32 %v1003, %v1027
      %v1037 = vsel %vm406, %v1015, 0.0
      %1039 = vrot.lane.b32.xlu0 %v1012, 112
      %v1040 = vpop.permute.xlu0 %1039
      %1041 = vrot.lane.b32.xlu0 %v1014, 112
      %v1042 = vpop.permute.xlu0 %1041
      %1043 = vrot.lane.b32.xlu0 %v1016, 112
      %v1044 = vpop.permute.xlu0 %1043
      %1045 = vrot.lane.b32.xlu0 %v1037, 112
      %v1046 = vpop.permute.xlu0 %1045
      %v1051 = vadd.f32 %v1032, %v1040
      %v1052 = vadd.f32 %v1033, %v1042
      %v1053 = vadd.f32 %v1034, %v1044
      %v1054 = vadd.f32 %v1035, %v1046
      %s1055 = scalar_lea.vmem %s5, 2
      %v1056 = vld [vmem:[%s1055] sm:$0x1]
      %v1058 = vlaneseq
      %v1059 = vshrl.u32 %v1058, 7
      %v1060 = vsub.s32 0, %v1059
      %v1061 = vrot.slane %v1056, %v1060
      %1062 = vrot.lane.b32.xlu0 %v1061, 16
      %v1063 = vpop.permute.xlu0 %1062
      %v1065 = vadd.f32 %v1051, %v1063
      %v1066 = vadd.f32 %v1052, %v1063
      %v1067 = vadd.f32 %v1053, %v1063
      %v1068 = vadd.f32 %v1054, %v1063
      %v1069 = vmax.f32 %v1065, 0.0
      %v1070 = vmax.f32 %v1066, 0.0
      %v1071 = vmax.f32 %v1067, 0.0
      %v1072 = vmax.f32 %v1068, 0.0
      %v1073 = vpack.c.bf16 %v1070, %v1069
      %v1074 = vpack.c.bf16 %v1072, %v1071
      %s1075 = scalar_lea.vmem %s6, 16
      %v1076 = vld [vmem:[%s1075] sm:$0xf]
      %v1077 = vld [vmem:[%s1075 + $0x4] sm:$0xf]
      %s1078 = scalar_lea.vmem %s7, 2
      %v1079 = vld [vmem:[%s1078] sm:$0x1]
      %v1081 = vlaneseq
      %v1082 = vshrl.u32 %v1081, 7
      %v1083 = vsub.s32 0, %v1082
      %v1084 = vrot.slane %v1079, %v1083
      %1088 = vrot.lane.b32.xlu0 %v1073, 112
      %v1089 = vpop.permute.xlu0 %1088
      %1090 = vrot.lane.b32.xlu0 %v1074, 112
      %v1091 = vpop.permute.xlu0 %1090
      %v1094 = vunpack.c.l.b16 %v1076
      %v1095 = vunpack.c.l.b16 %v1077
      %v1096 = vpack.c.b16 %v1095, %v1094
      %v1099 = vsel %vm493, %v1089, 0
      %v1102 = vsel %vm493, %v1091, 0
      %1104 = vmatprep.subr.bf16.mxu0 0
      %1105 = vmatpush1.bf16.msra.mxu0 0
      %1106 = vmatprep.subr.bf16.mxu0 0
      %1107 = vmatpush1.bf16.msra.mxu0 0
      %1108 = vmatprep.subr.bf16.mxu0 0
      %1109 = vmatpush1.bf16.msra.mxu0 0
      %1110 = vmatprep.subr.bf16.mxu0 0
      %1111 = vmatpush1.bf16.msra.mxu0 0
      %1112 = vmatprep.subr.bf16.mxu0 0
      %1113 = vmatpush1.bf16.msra.mxu0 0
      %1114 = vmatprep.subr.bf16.mxu0 0
      %1115 = vmatpush1.bf16.msra.mxu0 0
      %1116 = vmatprep.subr.bf16.mxu0 0
      %1117 = vmatpush1.bf16.msra.mxu0 0
      %1118 = vmatprep.subr.bf16.mxu0 0
      %1119 = vmatpush1.bf16.msra.mxu0 %v1096
      %1120 = vmatprep.subr.bf16.mxu0 0
      %1121 = vmatpush2.bf16.msra.mxu0 0
      %1122 = vmatprep.subr.bf16.mxu0 0
      %1123 = vmatpush2.bf16.msra.mxu0 0
      %1124 = vmatprep.subr.bf16.mxu0 0
      %1125 = vmatpush2.bf16.msra.mxu0 0
      %1126 = vmatprep.subr.bf16.mxu0 0
      %1127 = vmatpush2.bf16.msra.mxu0 0
      %1128 = vmatprep.subr.bf16.mxu0 0
      %1129 = vmatpush2.bf16.msra.mxu0 0
      %1130 = vmatprep.subr.bf16.mxu0 0
      %1131 = vmatpush2.bf16.msra.mxu0 0
      %1132 = vmatprep.subr.bf16.mxu0 0
      %1133 = vmatpush2.bf16.msra.mxu0 0
      %1134 = vmatprep.subr.bf16.mxu0 0
      %1135 = vmatpush2.bf16.msra.mxu0 0
      %1136 = vmatprep.mubr.bf16.mxu0 0
      %1137 = vmatmul.mubr.bf16.gmra.mxu0 %v1099
      %v1138 = vpop.f32.mrf.mxu0
      %v1139 = vadd.f32 %v1084, %v1138
      %v1140 = vpop.f32.mrf.mxu0
      %v1141 = vpop.f32.mrf.mxu0
      %v1142 = vadd.f32 %v1084, %v1141
      %v1143 = vpop.f32.mrf.mxu0
      %1144 = vmatprep.mubr.bf16.mxu0 0
      %1145 = vmatmul.mubr.bf16.gmra.mxu0 %v1102
      %v1146 = vpop.f32.mrf.mxu0
      %v1147 = vadd.f32 %v1084, %v1146
      %v1148 = vpop.f32.mrf.mxu0
      %v1149 = vpop.f32.mrf.mxu0
      %v1150 = vadd.f32 %v1084, %v1149
      %v1151 = vpop.f32.mrf.mxu0
      %1152 = vdwg.mxu0
      %v1153 = vadd.f32 %v936, %v1139
      %v1154 = vadd.f32 %v937, %v1142
      %v1155 = vadd.f32 %v938, %v1147
      %v1156 = vadd.f32 %v939, %v1150
      %v1157 = vmul.f32 %v1153, %v462
      %v1158 = vmul.f32 %v1154, %v467
      %v1159 = vmul.f32 %v1155, %v472
      %v1160 = vmul.f32 %v1156, %v477
      %v1161 = vpack.c.bf16 %v1158, %v1157
      %v1162 = vpack.c.bf16 %v1160, %v1159
      %v1163 = vld [vmem:[%s8] sm:$0xf]
      %v1164 = vld [vmem:[%s8 + $0x4] sm:$0xf]
      %v1165 = vld [vmem:[%s9] sm:$0x1]
      %v1167 = vlaneseq
      %v1168 = vshrl.u32 %v1167, 7
      %v1169 = vsub.s32 0, %v1168
      %v1170 = vrot.slane %v1165, %v1169
      %v1174 = vunpack.c.l.b16 %v1163
      %v1175 = vunpack.c.l.b16 %v1164
      %v1176 = vpack.c.b16 %v1175, %v1174
      %v1179 = vsel %vm493, %v1161, 0
      %v1182 = vsel %vm493, %v1162, 0
      %1184 = vmatprep.subr.bf16.mxu0 0
      %1185 = vmatpush1.bf16.msra.mxu0 0
      %1186 = vmatprep.subr.bf16.mxu0 0
      %1187 = vmatpush1.bf16.msra.mxu0 0
      %1188 = vmatprep.subr.bf16.mxu0 0
      %1189 = vmatpush1.bf16.msra.mxu0 0
      %1190 = vmatprep.subr.bf16.mxu0 0
      %1191 = vmatpush1.bf16.msra.mxu0 0
      %1192 = vmatprep.subr.bf16.mxu0 0
      %1193 = vmatpush1.bf16.msra.mxu0 0
      %1194 = vmatprep.subr.bf16.mxu0 0
      %1195 = vmatpush1.bf16.msra.mxu0 0
      %1196 = vmatprep.subr.bf16.mxu0 0
      %1197 = vmatpush1.bf16.msra.mxu0 0
      %1198 = vmatprep.subr.bf16.mxu0 0
      %1199 = vmatpush1.bf16.msra.mxu0 %v1176
      %1200 = vmatprep.subr.bf16.mxu0 0
      %1201 = vmatpush2.bf16.msra.mxu0 0
      %1202 = vmatprep.subr.bf16.mxu0 0
      %1203 = vmatpush2.bf16.msra.mxu0 0
      %1204 = vmatprep.subr.bf16.mxu0 0
      %1205 = vmatpush2.bf16.msra.mxu0 0
      %1206 = vmatprep.subr.bf16.mxu0 0
      %1207 = vmatpush2.bf16.msra.mxu0 0
      %1208 = vmatprep.subr.bf16.mxu0 0
      %1209 = vmatpush2.bf16.msra.mxu0 0
      %1210 = vmatprep.subr.bf16.mxu0 0
      %1211 = vmatpush2.bf16.msra.mxu0 0
      %1212 = vmatprep.subr.bf16.mxu0 0
      %1213 = vmatpush2.bf16.msra.mxu0 0
      %1214 = vmatprep.subr.bf16.mxu0 0
      %1215 = vmatpush2.bf16.msra.mxu0 0
      %1216 = vmatprep.mubr.bf16.mxu0 0
      %1217 = vmatmul.mubr.bf16.gmra.mxu0 %v1179
      %v1218 = vpop.f32.mrf.mxu0
      %v1219 = vadd.f32 %v1170, %v1218
      %v1220 = vpop.f32.mrf.mxu0
      %v1221 = vpop.f32.mrf.mxu0
      %v1222 = vadd.f32 %v1170, %v1221
      %v1223 = vpop.f32.mrf.mxu0
      %1224 = vmatprep.mubr.bf16.mxu0 0
      %1225 = vmatmul.mubr.bf16.gmra.mxu0 %v1182
      %v1226 = vpop.f32.mrf.mxu0
      %v1227 = vadd.f32 %v1170, %v1226
      %v1228 = vpop.f32.mrf.mxu0
      %v1229 = vpop.f32.mrf.mxu0
      %v1230 = vadd.f32 %v1170, %v1229
      %v1231 = vpop.f32.mrf.mxu0
      %1232 = vdwg.mxu0
      %v1233 = vmul.f32 %v1219, %v462
      %v1234 = vmul.f32 %v1222, %v467
      %v1235 = vmul.f32 %v1227, %v472
      %v1236 = vmul.f32 %v1230, %v477
      %vm1237 = vcmask 80896
      %1238 = vst.msk [vmem:[%s379] sm:$0xff] %vm1237, %v1233
      %1239 = vst.msk [vmem:[%s379 + $0x8] sm:$0xff] %vm1237, %v1234
      %1240 = vst.msk [vmem:[%s379 + $0x10] sm:$0xff] %vm1237, %v1235
      %1241 = vst.msk [vmem:[%s379 + $0x18] sm:$0xff] %vm1237, %v1236
      %p1242 = scmp.lt.s32.totalorder %s21, 1
      %s1243 = scalar_select %p1242, %s21, 1
      %s1244 = smul.addr %s1243, 4
      %s1245 = smul.addr %s1244, 8
      %s1246 = scalar_lea.vmem %s10, %s1245
      // Predicated region
      $region61: #{_lambda_.2} parent=59 // pred_check
        %p1247 = pneg %p259
      $region62: #{_lambda_.2} parent=59 // pred_check_branch
        %1249 = sbr.rel (%p1247) target = $region64
      $region63: #{_lambda_.2} parent=59 // pred_region
        _
      $region64: #{_lambda_.2} parent=59 // pred_fallthru
        _
    $region60: #{_lambda_.2} parent=5 // pred_fallthru
      _
    %p1250 = scmp.le.s32.totalorder 2, %s16
    // Predicated region
    $region65: #{_lambda_.2} parent=5 // pred_check
      %p1251 = pneg %p1250
    $region66: #{_lambda_.2} parent=5 // pred_check_branch
      %1253 = sbr.rel (%p1251) target = $region68
    $region67: #{_lambda_.2} parent=5 // pred_region
      %s1254 = ssub.s32 %s16, 2
      // Predicated region
      $region69: #{_lambda_.2} parent=67 // pred_check
        %p1255 = pneg %p265
      $region70: #{_lambda_.2} parent=67 // pred_check_branch
        %1257 = sbr.rel (%p1255) target = $region72
      $region71: #{_lambda_.2} parent=67 // pred_region
        %p1258 = scmp.lt.s32.totalorder %s22, 1
        %s1259 = scalar_select %p1258, %s22, 1
        %s1260 = smul.addr %s1259, 4
        %s1261 = smul.addr %s1260, 8
        %s1262 = scalar_lea.vmem %s10, %s1261
      $region72: #{_lambda_.2} parent=67 // pred_fallthru
        _
    $region68: #{_lambda_.2} parent=5 // pred_fallthru
      _
  $region6: #{_lambda_.2} parent=0 // loop_footer
    %s20 = sadd.s32 1, %s16
  $region7: #{_lambda_.2} parent=0 // loop_footer_branch
    %15 = sbr.rel target = $region3
  $region8: #{_lambda_.2} parent=0 // loop_exit
    _

// kernel: _lambda_.3
$region0: #{_lambda_.3}
  #allocation0 [shape = 'u32[]', space=smem, size = 0x4, offset = 0x4, fixed_abs, tag = 'smem constant byte address 0x4 - core index']
  #allocation1 [shape = 'u32[144,128]{1,0:T(1,128)}', space=vmem, size = 0x12000, scoped, tag = 'internal scratch']
  %s0 = inlined_call_operand.vmem [shape: f32[2,32,10], index: 0, kind: input, shape index: {}]
  %s1 = inlined_call_operand.vmem [shape: f32[2,32,1], index: 1, kind: input, shape index: {}]
  %s2 = inlined_call_operand.vmem [shape: bf16[10,16], index: 2, kind: input, shape index: {}]
  %s3 = inlined_call_operand.vmem [shape: f32[1,16], index: 3, kind: input, shape index: {}]
  %s4 = inlined_call_operand.vmem [shape: bf16[3,16,48], index: 4, kind: input, shape index: {}]
  %s5 = inlined_call_operand.vmem [shape: f32[3,1,16], index: 5, kind: input, shape index: {}]
  %s6 = inlined_call_operand.vmem [shape: bf16[3,16,16], index: 6, kind: input, shape index: {}]
  %s7 = inlined_call_operand.vmem [shape: f32[3,1,16], index: 7, kind: input, shape index: {}]
  %s8 = inlined_call_operand.vmem [shape: bf16[16,10], index: 8, kind: input, shape index: {}]
  %s9 = inlined_call_operand.vmem [shape: f32[1,10], index: 9, kind: input, shape index: {}]
  %s10 = inlined_call_operand.vmem [shape: f32[2,32,10], index: 10, kind: output, shape index: {}]
  %s11 = sld [smem:[#allocation0]]
  $region73: #{_lambda_.3} parent=0
    _
  %s13 = ssub.s32 1, %s11
  %s14 = scalar_select 0, %s13, %s11
  loop: start=0, step=1, limit=4
  $region2: #{_lambda_.3} parent=0 // loop_pre_header
    _
  $region3: #{_lambda_.3} parent=0 // loop_header
    %s16 = sphi 0, %s20
    %p17 = scmp.ge.s32.totalorder %s16, 4
    %s26 = sphi 0, %s28
    %s29 = sphi 0, %s26
    %s30 = sphi 0, %s29
    %s46 = sphi 0, %s30
    %s52 = sphi 0, %s54
    %s55 = sphi 0, %s52
    %s56 = sphi 0, %s55
    %s72 = sphi 0, %s56
    %s76 = sphi 0, %s76
    %s78 = sphi 0, %s76
    %s79 = sphi 0, %s78
    %s93 = sphi 0, %s79
    %s97 = sphi 0, %s97
    %s99 = sphi 0, %s97
    %s100 = sphi 0, %s99
    %s114 = sphi 0, %s100
    %s118 = sphi 0, %s118
    %s120 = sphi 0, %s118
    %s121 = sphi 0, %s120
    %s135 = sphi 0, %s121
    %s139 = sphi 0, %s139
    %s141 = sphi 0, %s139
    %s142 = sphi 0, %s141
    %s156 = sphi 0, %s142
    %s160 = sphi 0, %s160
    %s162 = sphi 0, %s160
    %s163 = sphi 0, %s162
    %s177 = sphi 0, %s163
    %s181 = sphi 0, %s181
    %s183 = sphi 0, %s181
    %s184 = sphi 0, %s183
    %s198 = sphi 0, %s184
    %s202 = sphi 0, %s202
    %s204 = sphi 0, %s202
    %s205 = sphi 0, %s204
    %s219 = sphi 0, %s205
    %s223 = sphi 0, %s223
    %s225 = sphi 0, %s223
    %s226 = sphi 0, %s225
    %s240 = sphi 0, %s226
    %s246 = sphi 0, %s248
    %s249 = sphi 0, %s246
    %s250 = sphi 0, %s249
    %s266 = sphi 0, %s250
  $region4: #{_lambda_.3} parent=0 // loop_header_branch
    %19 = sbr.rel (%p17) target = $region8
  $region5: #{_lambda_.3} parent=0 // loop_body
    %s21 = ssub.s32 %s16, 1
    %s22 = ssub.s32 %s16, 2
    %s23 = sadd.s32 %s16, 1
    %s24 = ssub.s32 %s16, %s23
    %p25 = scmp.eq.s32.totalorder %s24, 0
    %s27 = sadd.s32 %s26, 1
    %s28 = scalar_select %p25, %s26, %s27
    %p31 = pneg %p25
    %p32 = scmp.eq.s32.totalorder %s16, 1
    %p33 = por %p31, %p32
    %p34 = scmp.ne.s32.totalorder %s26, %s29
    %p35 = scmp.eq.s32.totalorder %s16, 0
    %p36 = por %p34, %p35
    %p37 = scmp.ne.s32.totalorder %s26, %s29
    %p38 = scmp.eq.s32.totalorder %s21, 1
    %p39 = por %p37, %p38
    %p40 = scmp.ne.s32.totalorder %s29, %s30
    %p41 = scmp.eq.s32.totalorder %s21, 0
    %p42 = por %p40, %p41
    %p43 = scmp.ne.s32.totalorder %s29, %s30
    %p44 = scmp.eq.s32.totalorder %s22, 1
    %p45 = por %p43, %p44
    %p47 = scmp.ne.s32.totalorder %s30, %s46
    %p48 = scmp.eq.s32.totalorder %s22, 0
    %p49 = por %p47, %p48
    %s50 = ssub.s32 %s16, %s23
    %p51 = scmp.eq.s32.totalorder %s50, 0
    %s53 = sadd.s32 %s52, 1
    %s54 = scalar_select %p51, %s52, %s53
    %p57 = pneg %p51
    %p58 = scmp.eq.s32.totalorder %s16, 1
    %p59 = por %p57, %p58
    %p60 = scmp.ne.s32.totalorder %s52, %s55
    %p61 = scmp.eq.s32.totalorder %s16, 0
    %p62 = por %p60, %p61
    %p63 = scmp.ne.s32.totalorder %s52, %s55
    %p64 = scmp.eq.s32.totalorder %s21, 1
    %p65 = por %p63, %p64
    %p66 = scmp.ne.s32.totalorder %s55, %s56
    %p67 = scmp.eq.s32.totalorder %s21, 0
    %p68 = por %p66, %p67
    %p69 = scmp.ne.s32.totalorder %s55, %s56
    %p70 = scmp.eq.s32.totalorder %s22, 1
    %p71 = por %p69, %p70
    %p73 = scmp.ne.s32.totalorder %s56, %s72
    %p74 = scmp.eq.s32.totalorder %s22, 0
    %p75 = por %p73, %p74
    %s77 = sadd.s32 %s76, 1
    %p80 = scmp.eq.s32.totalorder %s16, 1
    %p81 = scmp.ne.s32.totalorder %s76, %s78
    %p82 = scmp.eq.s32.totalorder %s16, 0
    %p83 = por %p81, %p82
    %p84 = scmp.ne.s32.totalorder %s76, %s78
    %p85 = scmp.eq.s32.totalorder %s21, 1
    %p86 = por %p84, %p85
    %p87 = scmp.ne.s32.totalorder %s78, %s79
    %p88 = scmp.eq.s32.totalorder %s21, 0
    %p89 = por %p87, %p88
    %p90 = scmp.ne.s32.totalorder %s78, %s79
    %p91 = scmp.eq.s32.totalorder %s22, 1
    %p92 = por %p90, %p91
    %p94 = scmp.ne.s32.totalorder %s79, %s93
    %p95 = scmp.eq.s32.totalorder %s22, 0
    %p96 = por %p94, %p95
    %s98 = sadd.s32 %s97, 1
    %p101 = scmp.eq.s32.totalorder %s16, 1
    %p102 = scmp.ne.s32.totalorder %s97, %s99
    %p103 = scmp.eq.s32.totalorder %s16, 0
    %p104 = por %p102, %p103
    %p105 = scmp.ne.s32.totalorder %s97, %s99
    %p106 = scmp.eq.s32.totalorder %s21, 1
    %p107 = por %p105, %p106
    %p108 = scmp.ne.s32.totalorder %s99, %s100
    %p109 = scmp.eq.s32.totalorder %s21, 0
    %p110 = por %p108, %p109
    %p111 = scmp.ne.s32.totalorder %s99, %s100
    %p112 = scmp.eq.s32.totalorder %s22, 1
    %p113 = por %p111, %p112
    %p115 = scmp.ne.s32.totalorder %s100, %s114
    %p116 = scmp.eq.s32.totalorder %s22, 0
    %p117 = por %p115, %p116
    %s119 = sadd.s32 %s118, 1
    %p122 = scmp.eq.s32.totalorder %s16, 1
    %p123 = scmp.ne.s32.totalorder %s118, %s120
    %p124 = scmp.eq.s32.totalorder %s16, 0
    %p125 = por %p123, %p124
    %p126 = scmp.ne.s32.totalorder %s118, %s120
    %p127 = scmp.eq.s32.totalorder %s21, 1
    %p128 = por %p126, %p127
    %p129 = scmp.ne.s32.totalorder %s120, %s121
    %p130 = scmp.eq.s32.totalorder %s21, 0
    %p131 = por %p129, %p130
    %p132 = scmp.ne.s32.totalorder %s120, %s121
    %p133 = scmp.eq.s32.totalorder %s22, 1
    %p134 = por %p132, %p133
    %p136 = scmp.ne.s32.totalorder %s121, %s135
    %p137 = scmp.eq.s32.totalorder %s22, 0
    %p138 = por %p136, %p137
    %s140 = sadd.s32 %s139, 1
    %p143 = scmp.eq.s32.totalorder %s16, 1
    %p144 = scmp.ne.s32.totalorder %s139, %s141
    %p145 = scmp.eq.s32.totalorder %s16, 0
    %p146 = por %p144, %p145
    %p147 = scmp.ne.s32.totalorder %s139, %s141
    %p148 = scmp.eq.s32.totalorder %s21, 1
    %p149 = por %p147, %p148
    %p150 = scmp.ne.s32.totalorder %s141, %s142
    %p151 = scmp.eq.s32.totalorder %s21, 0
    %p152 = por %p150, %p151
    %p153 = scmp.ne.s32.totalorder %s141, %s142
    %p154 = scmp.eq.s32.totalorder %s22, 1
    %p155 = por %p153, %p154
    %p157 = scmp.ne.s32.totalorder %s142, %s156
    %p158 = scmp.eq.s32.totalorder %s22, 0
    %p159 = por %p157, %p158
    %s161 = sadd.s32 %s160, 1
    %p164 = scmp.eq.s32.totalorder %s16, 1
    %p165 = scmp.ne.s32.totalorder %s160, %s162
    %p166 = scmp.eq.s32.totalorder %s16, 0
    %p167 = por %p165, %p166
    %p168 = scmp.ne.s32.totalorder %s160, %s162
    %p169 = scmp.eq.s32.totalorder %s21, 1
    %p170 = por %p168, %p169
    %p171 = scmp.ne.s32.totalorder %s162, %s163
    %p172 = scmp.eq.s32.totalorder %s21, 0
    %p173 = por %p171, %p172
    %p174 = scmp.ne.s32.totalorder %s162, %s163
    %p175 = scmp.eq.s32.totalorder %s22, 1
    %p176 = por %p174, %p175
    %p178 = scmp.ne.s32.totalorder %s163, %s177
    %p179 = scmp.eq.s32.totalorder %s22, 0
    %p180 = por %p178, %p179
    %s182 = sadd.s32 %s181, 1
    %p185 = scmp.eq.s32.totalorder %s16, 1
    %p186 = scmp.ne.s32.totalorder %s181, %s183
    %p187 = scmp.eq.s32.totalorder %s16, 0
    %p188 = por %p186, %p187
    %p189 = scmp.ne.s32.totalorder %s181, %s183
    %p190 = scmp.eq.s32.totalorder %s21, 1
    %p191 = por %p189, %p190
    %p192 = scmp.ne.s32.totalorder %s183, %s184
    %p193 = scmp.eq.s32.totalorder %s21, 0
    %p194 = por %p192, %p193
    %p195 = scmp.ne.s32.totalorder %s183, %s184
    %p196 = scmp.eq.s32.totalorder %s22, 1
    %p197 = por %p195, %p196
    %p199 = scmp.ne.s32.totalorder %s184, %s198
    %p200 = scmp.eq.s32.totalorder %s22, 0
    %p201 = por %p199, %p200
    %s203 = sadd.s32 %s202, 1
    %p206 = scmp.eq.s32.totalorder %s16, 1
    %p207 = scmp.ne.s32.totalorder %s202, %s204
    %p208 = scmp.eq.s32.totalorder %s16, 0
    %p209 = por %p207, %p208
    %p210 = scmp.ne.s32.totalorder %s202, %s204
    %p211 = scmp.eq.s32.totalorder %s21, 1
    %p212 = por %p210, %p211
    %p213 = scmp.ne.s32.totalorder %s204, %s205
    %p214 = scmp.eq.s32.totalorder %s21, 0
    %p215 = por %p213, %p214
    %p216 = scmp.ne.s32.totalorder %s204, %s205
    %p217 = scmp.eq.s32.totalorder %s22, 1
    %p218 = por %p216, %p217
    %p220 = scmp.ne.s32.totalorder %s205, %s219
    %p221 = scmp.eq.s32.totalorder %s22, 0
    %p222 = por %p220, %p221
    %s224 = sadd.s32 %s223, 1
    %p227 = scmp.eq.s32.totalorder %s16, 1
    %p228 = scmp.ne.s32.totalorder %s223, %s225
    %p229 = scmp.eq.s32.totalorder %s16, 0
    %p230 = por %p228, %p229
    %p231 = scmp.ne.s32.totalorder %s223, %s225
    %p232 = scmp.eq.s32.totalorder %s21, 1
    %p233 = por %p231, %p232
    %p234 = scmp.ne.s32.totalorder %s225, %s226
    %p235 = scmp.eq.s32.totalorder %s21, 0
    %p236 = por %p234, %p235
    %p237 = scmp.ne.s32.totalorder %s225, %s226
    %p238 = scmp.eq.s32.totalorder %s22, 1
    %p239 = por %p237, %p238
    %p241 = scmp.ne.s32.totalorder %s226, %s240
    %p242 = scmp.eq.s32.totalorder %s22, 0
    %p243 = por %p241, %p242
    %s244 = ssub.s32 %s16, %s23
    %p245 = scmp.eq.s32.totalorder %s244, 0
    %s247 = sadd.s32 %s246, 1
    %s248 = scalar_select %p245, %s246, %s247
    %p251 = pneg %p245
    %p252 = scmp.eq.s32.totalorder %s16, 1
    %p253 = por %p251, %p252
    %p254 = scmp.ne.s32.totalorder %s246, %s249
    %p255 = scmp.eq.s32.totalorder %s16, 0
    %p256 = por %p254, %p255
    %p257 = scmp.ne.s32.totalorder %s246, %s249
    %p258 = scmp.eq.s32.totalorder %s21, 1
    %p259 = por %p257, %p258
    %p260 = scmp.ne.s32.totalorder %s249, %s250
    %p261 = scmp.eq.s32.totalorder %s21, 0
    %p262 = por %p260, %p261
    %p263 = scmp.ne.s32.totalorder %s249, %s250
    %p264 = scmp.eq.s32.totalorder %s22, 1
    %p265 = por %p263, %p264
    %p267 = scmp.ne.s32.totalorder %s250, %s266
    %p268 = scmp.eq.s32.totalorder %s22, 0
    %p269 = por %p267, %p268
    %p270 = scmp.le.s32.totalorder 1, %s16
    %p271 = scmp.lt.s32.totalorder %s16, 3
    %p272 = pnand %p270, %p271
    %p273 = pneg %p272
    // Predicated region
    $region9: #{_lambda_.3} parent=5 // pred_check
      _
    $region10: #{_lambda_.3} parent=5 // pred_check_branch
      %275 = sbr.rel (%p272) target = $region12
    $region11: #{_lambda_.3} parent=5 // pred_region
      %s276 = ssub.s32 %s16, 1
      // Predicated region
      $region13: #{_lambda_.3} parent=11 // pred_check
        %p277 = pneg %p89
      $region14: #{_lambda_.3} parent=11 // pred_check_branch
        %279 = sbr.rel (%p277) target = $region16
      $region15: #{_lambda_.3} parent=11 // pred_region
        _
      $region16: #{_lambda_.3} parent=11 // pred_fallthru
        _
      // Predicated region
      $region17: #{_lambda_.3} parent=11 // pred_check
        %p280 = pneg %p110
      $region18: #{_lambda_.3} parent=11 // pred_check_branch
        %282 = sbr.rel (%p280) target = $region20
      $region19: #{_lambda_.3} parent=11 // pred_region
        _
      $region20: #{_lambda_.3} parent=11 // pred_fallthru
        _
      // Predicated region
      $region21: #{_lambda_.3} parent=11 // pred_check
        %p283 = pneg %p131
      $region22: #{_lambda_.3} parent=11 // pred_check_branch
        %285 = sbr.rel (%p283) target = $region24
      $region23: #{_lambda_.3} parent=11 // pred_region
        _
      $region24: #{_lambda_.3} parent=11 // pred_fallthru
        _
      // Predicated region
      $region25: #{_lambda_.3} parent=11 // pred_check
        %p286 = pneg %p152
      $region26: #{_lambda_.3} parent=11 // pred_check_branch
        %288 = sbr.rel (%p286) target = $region28
      $region27: #{_lambda_.3} parent=11 // pred_region
        _
      $region28: #{_lambda_.3} parent=11 // pred_fallthru
        _
      // Predicated region
      $region29: #{_lambda_.3} parent=11 // pred_check
        %p289 = pneg %p173
      $region30: #{_lambda_.3} parent=11 // pred_check_branch
        %291 = sbr.rel (%p289) target = $region32
      $region31: #{_lambda_.3} parent=11 // pred_region
        _
      $region32: #{_lambda_.3} parent=11 // pred_fallthru
        _
      // Predicated region
      $region33: #{_lambda_.3} parent=11 // pred_check
        %p292 = pneg %p194
      $region34: #{_lambda_.3} parent=11 // pred_check_branch
        %294 = sbr.rel (%p292) target = $region36
      $region35: #{_lambda_.3} parent=11 // pred_region
        _
      $region36: #{_lambda_.3} parent=11 // pred_fallthru
        _
      // Predicated region
      $region37: #{_lambda_.3} parent=11 // pred_check
        %p295 = pneg %p215
      $region38: #{_lambda_.3} parent=11 // pred_check_branch
        %297 = sbr.rel (%p295) target = $region40
      $region39: #{_lambda_.3} parent=11 // pred_region
        _
      $region40: #{_lambda_.3} parent=11 // pred_fallthru
        _
      // Predicated region
      $region41: #{_lambda_.3} parent=11 // pred_check
        %p298 = pneg %p236
      $region42: #{_lambda_.3} parent=11 // pred_check_branch
        %300 = sbr.rel (%p298) target = $region44
      $region43: #{_lambda_.3} parent=11 // pred_region
        _
      $region44: #{_lambda_.3} parent=11 // pred_fallthru
        _
    $region12: #{_lambda_.3} parent=5 // pred_fallthru
      _
    %p301 = scmp.lt.s32.totalorder %s16, 2
    // Predicated region
    $region45: #{_lambda_.3} parent=5 // pred_check
      %p302 = pneg %p301
    $region46: #{_lambda_.3} parent=5 // pred_check_branch
      %304 = sbr.rel (%p302) target = $region48
    $region47: #{_lambda_.3} parent=5 // pred_region
      // Predicated region
      $region49: #{_lambda_.3} parent=47 // pred_check
        %p305 = pneg %p36
      $region50: #{_lambda_.3} parent=47 // pred_check_branch
        %307 = sbr.rel (%p305) target = $region52
      $region51: #{_lambda_.3} parent=47 // pred_region
        %p308 = scmp.lt.s32.totalorder %s16, 1
        %s309 = scalar_select %p308, %s16, 1
        %s310 = smul.addr %s309, 4
        %s311 = smul.addr %s310, 8
        %s312 = scalar_lea.vmem %s0, %s311
      $region52: #{_lambda_.3} parent=47 // pred_fallthru
        _
      // Predicated region
      $region53: #{_lambda_.3} parent=47 // pred_check
        %p313 = pneg %p62
      $region54: #{_lambda_.3} parent=47 // pred_check_branch
        %315 = sbr.rel (%p313) target = $region56
      $region55: #{_lambda_.3} parent=47 // pred_region
        %p316 = scmp.lt.s32.totalorder %s16, 1
        %s317 = scalar_select %p316, %s16, 1
        %s318 = smul.addr %s317, 4
        %s319 = smul.addr %s318, 8
        %s320 = scalar_lea.vmem %s1, %s319
      $region56: #{_lambda_.3} parent=47 // pred_fallthru
        _
    $region48: #{_lambda_.3} parent=5 // pred_fallthru
      _
    %p321 = scmp.le.s32.totalorder 1, %s16
    %p322 = scmp.lt.s32.totalorder %s16, 3
    %p323 = pnand %p321, %p322
    %p324 = pneg %p323
    // Predicated region
    $region57: #{_lambda_.3} parent=5 // pred_check
      _
    $region58: #{_lambda_.3} parent=5 // pred_check_branch
      %326 = sbr.rel (%p323) target = $region60
    $region59: #{_lambda_.3} parent=5 // pred_region
      %s327 = ssub.s32 %s16, 1
      %p328 = scmp.lt.s32.totalorder %s21, 1
      %s329 = scalar_select %p328, %s21, 1
      %s330 = smul.addr %s329, 4
      %s331 = smul.addr %s330, 8
      %s332 = scalar_lea.vmem %s0, %s331
      %p333 = pneg %p42
      %p334 = pneg %p39
      %p335 = scmp.lt.s32.totalorder %s21, 1
      %s336 = scalar_select %p335, %s21, 1
      %s337 = smul.addr %s336, 4
      %s338 = smul.addr %s337, 8
      %s339 = scalar_lea.vmem %s1, %s338
      %p340 = pneg %p68
      %p341 = pneg %p65
      %p342 = pneg %p89
      %p343 = pneg %p86
      %p344 = pneg %p110
      %p345 = pneg %p107
      %p346 = pneg %p131
      %p347 = pneg %p128
      %p348 = pneg %p152
      %p349 = pneg %p149
      %p350 = pneg %p173
      %p351 = pneg %p170
      %p352 = pneg %p194
      %p353 = pneg %p191
      %p354 = pneg %p215
      %p355 = pneg %p212
      %p356 = pneg %p236
      %p357 = pneg %p233
      %p358 = pneg %p262
      %p359 = pneg %p259
      %p360 = scmp.lt.s32.totalorder %s21, 1
      %s361 = scalar_select %p360, %s21, 1
      %s362 = smul.addr %s361, 4
      %s363 = smul.addr %s362, 8
      %s364 = scalar_lea.vmem %s10, %s363
      %p365 = scmp.lt.s32.totalorder %s21, 1
      %s366 = scalar_select %p365, %s21, 1
      %s367 = smul.addr %s366, 4
      %s368 = smul.addr %s367, 8
      %s369 = scalar_lea.vmem %s0, %s368
      %p370 = scmp.lt.s32.totalorder %s21, 1
      %s371 = scalar_select %p370, %s21, 1
      %s372 = smul.addr %s371, 4
      %s373 = smul.addr %s372, 8
      %s374 = scalar_lea.vmem %s1, %s373
      %p375 = scmp.lt.s32.totalorder %s21, 1
      %s376 = scalar_select %p375, %s21, 1
      %s377 = smul.addr %s376, 4
      %s378 = smul.addr %s377, 8
      %s379 = scalar_lea.vmem %s10, %s378
      %v381 = vld [vmem:[%s374] sm:$0xff]
      %v382 = vld [vmem:[%s374 + $0x8] sm:$0xff]
      %v383 = vld [vmem:[%s374 + $0x10] sm:$0xff]
      %v384 = vld [vmem:[%s374 + $0x18] sm:$0xff]
      %v385 = vld [vmem:[%s369] sm:$0xff]
      %v386 = vld [vmem:[%s369 + $0x8] sm:$0xff]
      %v387 = vld [vmem:[%s369 + $0x10] sm:$0xff]
      %v388 = vld [vmem:[%s369 + $0x18] sm:$0xff]
      %v389 = vpack.c.bf16 %v386, %v385
      %v390 = vpack.c.bf16 %v388, %v387
      %v391 = vld [vmem:[%s2] sm:$0xf]
      %v392 = vld [vmem:[%s2 + $0x4] sm:$0x1]
      %v393 = vld [vmem:[%s3] sm:$0x1]
      %v395 = vlaneseq
      %v396 = vshrl.u32 %v395, 7
      %v397 = vsub.s32 0, %v396
      %v398 = vrot.slane %v393, %v397
      %v402 = vunpack.c.l.b16 %v391
      %v403 = vunpack.c.l.b16 %v392
      %v404 = vpack.c.b16 %v403, %v402
      %vm405 = vcmask 80896
      %v407 = vsel %vm405, %v389, 0
      %v410 = vsel %vm405, %v390, 0
      %vm412 = vcmask 1044480
      %v414 = vsel %vm412, %v404, 0
      %416 = vmatprep.subr.bf16.mxu0 0
      %417 = vmatpush1.bf16.msra.mxu0 0
      %418 = vmatprep.subr.bf16.mxu0 0
      %419 = vmatpush1.bf16.msra.mxu0 0
      %420 = vmatprep.subr.bf16.mxu0 0
      %421 = vmatpush1.bf16.msra.mxu0 0
      %422 = vmatprep.subr.bf16.mxu0 0
      %423 = vmatpush1.bf16.msra.mxu0 0
      %424 = vmatprep.subr.bf16.mxu0 0
      %425 = vmatpush1.bf16.msra.mxu0 0
      %426 = vmatprep.subr.bf16.mxu0 0
      %427 = vmatpush1.bf16.msra.mxu0 0
      %428 = vmatprep.subr.bf16.mxu0 0
      %429 = vmatpush1.bf16.msra.mxu0 0
      %430 = vmatprep.subr.bf16.mxu0 0
      %431 = vmatpush1.bf16.msra.mxu0 %v414
      %432 = vmatprep.subr.bf16.mxu0 0
      %433 = vmatpush2.bf16.msra.mxu0 0
      %434 = vmatprep.subr.bf16.mxu0 0
      %435 = vmatpush2.bf16.msra.mxu0 0
      %436 = vmatprep.subr.bf16.mxu0 0
      %437 = vmatpush2.bf16.msra.mxu0 0
      %438 = vmatprep.subr.bf16.mxu0 0
      %439 = vmatpush2.bf16.msra.mxu0 0
      %440 = vmatprep.subr.bf16.mxu0 0
      %441 = vmatpush2.bf16.msra.mxu0 0
      %442 = vmatprep.subr.bf16.mxu0 0
      %443 = vmatpush2.bf16.msra.mxu0 0
      %444 = vmatprep.subr.bf16.mxu0 0
      %445 = vmatpush2.bf16.msra.mxu0 0
      %446 = vmatprep.subr.bf16.mxu0 0
      %447 = vmatpush2.bf16.msra.mxu0 0
      %448 = vmatprep.mubr.bf16.mxu0 0
      %449 = vmatmul.mubr.bf16.gmra.mxu0 %v407
      %v450 = vpop.f32.mrf.mxu0
      %v451 = vadd.f32 %v398, %v450
      %v452 = vpop.f32.mrf.mxu0
      %v453 = vpop.f32.mrf.mxu0
      %v454 = vadd.f32 %v398, %v453
      %v455 = vpop.f32.mrf.mxu0
      %456 = vmatprep.mubr.bf16.mxu0 0
      %457 = vmatmul.mubr.bf16.gmra.mxu0 %v410
      %v458 = vpop.f32.mrf.mxu0
      %v459 = vadd.f32 %v398, %v458
      %v460 = vpop.f32.mrf.mxu0
      %v461 = vpop.f32.mrf.mxu0
      %v462 = vadd.f32 %v398, %v461
      %v463 = vpop.f32.mrf.mxu0
      %464 = vdwg.mxu0
      %466 = vset.pattern.permute.xlu0 0
      %467 = vperm.xlu0 %466, %v381
      %v468 = vpop.permute.xlu0 %467
      %471 = vset.pattern.permute.xlu0 0
      %472 = vperm.xlu0 %471, %v382
      %v473 = vpop.permute.xlu0 %472
      %476 = vset.pattern.permute.xlu0 0
      %477 = vperm.xlu0 %476, %v383
      %v478 = vpop.permute.xlu0 %477
      %481 = vset.pattern.permute.xlu0 0
      %482 = vperm.xlu0 %481, %v384
      %v483 = vpop.permute.xlu0 %482
      %v485 = vmul.f32 %v451, %v468
      %v486 = vmul.f32 %v454, %v473
      %v487 = vmul.f32 %v459, %v478
      %v488 = vmul.f32 %v462, %v483
      %v489 = vpack.c.bf16 %v486, %v485
      %v490 = vpack.c.bf16 %v488, %v487
      %v491 = vld [vmem:[%s4] sm:$0xf]
      %v492 = vld [vmem:[%s4 + $0x4] sm:$0xf]
      %v495 = vunpack.c.l.b16 %v491
      %v496 = vunpack.c.l.b16 %v492
      %v497 = vpack.c.b16 %v496, %v495
      %vm499 = vcmask 130048
      %v501 = vsel %vm499, %v489, 0
      %v504 = vsel %vm499, %v490, 0
      %506 = vmatprep.subr.bf16.mxu0 0
      %507 = vmatpush1.bf16.msra.mxu0 0
      %508 = vmatprep.subr.bf16.mxu0 0
      %509 = vmatpush1.bf16.msra.mxu0 0
      %510 = vmatprep.subr.bf16.mxu0 0
      %511 = vmatpush1.bf16.msra.mxu0 0
      %512 = vmatprep.subr.bf16.mxu0 0
      %513 = vmatpush1.bf16.msra.mxu0 0
      %514 = vmatprep.subr.bf16.mxu0 0
      %515 = vmatpush1.bf16.msra.mxu0 0
      %516 = vmatprep.subr.bf16.mxu0 0
      %517 = vmatpush1.bf16.msra.mxu0 0
      %518 = vmatprep.subr.bf16.mxu0 0
      %519 = vmatpush1.bf16.msra.mxu0 0
      %520 = vmatprep.subr.bf16.mxu0 0
      %521 = vmatpush1.bf16.msra.mxu0 %v497
      %522 = vmatprep.subr.bf16.mxu0 0
      %523 = vmatpush2.bf16.msra.mxu0 0
      %524 = vmatprep.subr.bf16.mxu0 0
      %525 = vmatpush2.bf16.msra.mxu0 0
      %526 = vmatprep.subr.bf16.mxu0 0
      %527 = vmatpush2.bf16.msra.mxu0 0
      %528 = vmatprep.subr.bf16.mxu0 0
      %529 = vmatpush2.bf16.msra.mxu0 0
      %530 = vmatprep.subr.bf16.mxu0 0
      %531 = vmatpush2.bf16.msra.mxu0 0
      %532 = vmatprep.subr.bf16.mxu0 0
      %533 = vmatpush2.bf16.msra.mxu0 0
      %534 = vmatprep.subr.bf16.mxu0 0
      %535 = vmatpush2.bf16.msra.mxu0 0
      %536 = vmatprep.subr.bf16.mxu0 0
      %537 = vmatpush2.bf16.msra.mxu0 0
      %538 = vmatprep.mubr.bf16.mxu0 0
      %539 = vmatmul.mubr.bf16.gmra.mxu0 %v501
      %v540 = vpop.f32.mrf.mxu0
      %v541 = vadd.f32 0.0, %v540
      %v542 = vpop.f32.mrf.mxu0
      %v543 = vpop.f32.mrf.mxu0
      %v544 = vadd.f32 0.0, %v543
      %v545 = vpop.f32.mrf.mxu0
      %546 = vmatprep.mubr.bf16.mxu0 0
      %547 = vmatmul.mubr.bf16.gmra.mxu0 %v504
      %v548 = vpop.f32.mrf.mxu0
      %v549 = vadd.f32 0.0, %v548
      %v550 = vpop.f32.mrf.mxu0
      %v551 = vpop.f32.mrf.mxu0
      %v552 = vadd.f32 0.0, %v551
      %v553 = vpop.f32.mrf.mxu0
      %554 = vdwg.mxu0
      %vm559 = vcmask 1040384
      %v560 = vrot.slane %v541, 7
      %v561 = vrot.slane %v544, 7
      %v562 = vsel %vm559, %v560, %v561
      %v563 = vrot.slane %v549, 7
      %v564 = vsel %vm559, %v561, %v563
      %v565 = vrot.slane %v552, 7
      %v566 = vsel %vm559, %v563, %v565
      %v568 = vsel %vm559, 0.0, %v560
      %570 = vrot.lane.b32.xlu0 %v568, 16
      %v571 = vpop.permute.xlu0 %570
      %572 = vrot.lane.b32.xlu0 %v562, 16
      %v573 = vpop.permute.xlu0 %572
      %574 = vrot.lane.b32.xlu0 %v564, 16
      %v575 = vpop.permute.xlu0 %574
      %576 = vrot.lane.b32.xlu0 %v566, 16
      %v577 = vpop.permute.xlu0 %576
      %v582 = vadd.f32 %v541, %v571
      %v583 = vadd.f32 %v544, %v573
      %v584 = vadd.f32 %v549, %v575
      %v585 = vadd.f32 %v552, %v577
      %vm586 = vcmask 1046528
      %v587 = vrot.slane %v541, 1
      %v588 = vrot.slane %v544, 1
      %v589 = vsel %vm586, %v587, %v588
      %v590 = vrot.slane %v549, 1
      %v591 = vsel %vm586, %v588, %v590
      %v592 = vrot.slane %v552, 1
      %v593 = vsel %vm586, %v590, %v592
      %v595 = vsel %vm586, %v592, 0.0
      %597 = vrot.lane.b32.xlu0 %v589, 112
      %v598 = vpop.permute.xlu0 %597
      %599 = vrot.lane.b32.xlu0 %v591, 112
      %v600 = vpop.permute.xlu0 %599
      %601 = vrot.lane.b32.xlu0 %v593, 112
      %v602 = vpop.permute.xlu0 %601
      %603 = vrot.lane.b32.xlu0 %v595, 112
      %v604 = vpop.permute.xlu0 %603
      %v609 = vadd.f32 %v582, %v598
      %v610 = vadd.f32 %v583, %v600
      %v611 = vadd.f32 %v584, %v602
      %v612 = vadd.f32 %v585, %v604
      %v613 = vld [vmem:[%s5] sm:$0x1]
      %v615 = vlaneseq
      %v616 = vshrl.u32 %v615, 7
      %v617 = vsub.s32 0, %v616
      %v618 = vrot.slane %v613, %v617
      %619 = vrot.lane.b32.xlu0 %v618, 16
      %v620 = vpop.permute.xlu0 %619
      %v622 = vadd.f32 %v609, %v620
      %v623 = vadd.f32 %v610, %v620
      %v624 = vadd.f32 %v611, %v620
      %v625 = vadd.f32 %v612, %v620
      %v626 = vmax.f32 %v622, 0.0
      %v627 = vmax.f32 %v623, 0.0
      %v628 = vmax.f32 %v624, 0.0
      %v629 = vmax.f32 %v625, 0.0
      %v630 = vpack.c.bf16 %v627, %v626
      %v631 = vpack.c.bf16 %v629, %v628
      %v632 = vld [vmem:[%s6] sm:$0xf]
      %v633 = vld [vmem:[%s6 + $0x4] sm:$0xf]
      %v634 = vld [vmem:[%s7] sm:$0x1]
      %v636 = vlaneseq
      %v637 = vshrl.u32 %v636, 7
      %v638 = vsub.s32 0, %v637
      %v639 = vrot.slane %v634, %v638
      %643 = vrot.lane.b32.xlu0 %v630, 112
      %v644 = vpop.permute.xlu0 %643
      %645 = vrot.lane.b32.xlu0 %v631, 112
      %v646 = vpop.permute.xlu0 %645
      %v649 = vunpack.c.l.b16 %v632
      %v650 = vunpack.c.l.b16 %v633
      %v651 = vpack.c.b16 %v650, %v649
      %v654 = vsel %vm499, %v644, 0
      %v657 = vsel %vm499, %v646, 0
      %659 = vmatprep.subr.bf16.mxu0 0
      %660 = vmatpush1.bf16.msra.mxu0 0
      %661 = vmatprep.subr.bf16.mxu0 0
      %662 = vmatpush1.bf16.msra.mxu0 0
      %663 = vmatprep.subr.bf16.mxu0 0
      %664 = vmatpush1.bf16.msra.mxu0 0
      %665 = vmatprep.subr.bf16.mxu0 0
      %666 = vmatpush1.bf16.msra.mxu0 0
      %667 = vmatprep.subr.bf16.mxu0 0
      %668 = vmatpush1.bf16.msra.mxu0 0
      %669 = vmatprep.subr.bf16.mxu0 0
      %670 = vmatpush1.bf16.msra.mxu0 0
      %671 = vmatprep.subr.bf16.mxu0 0
      %672 = vmatpush1.bf16.msra.mxu0 0
      %673 = vmatprep.subr.bf16.mxu0 0
      %674 = vmatpush1.bf16.msra.mxu0 %v651
      %675 = vmatprep.subr.bf16.mxu0 0
      %676 = vmatpush2.bf16.msra.mxu0 0
      %677 = vmatprep.subr.bf16.mxu0 0
      %678 = vmatpush2.bf16.msra.mxu0 0
      %679 = vmatprep.subr.bf16.mxu0 0
      %680 = vmatpush2.bf16.msra.mxu0 0
      %681 = vmatprep.subr.bf16.mxu0 0
      %682 = vmatpush2.bf16.msra.mxu0 0
      %683 = vmatprep.subr.bf16.mxu0 0
      %684 = vmatpush2.bf16.msra.mxu0 0
      %685 = vmatprep.subr.bf16.mxu0 0
      %686 = vmatpush2.bf16.msra.mxu0 0
      %687 = vmatprep.subr.bf16.mxu0 0
      %688 = vmatpush2.bf16.msra.mxu0 0
      %689 = vmatprep.subr.bf16.mxu0 0
      %690 = vmatpush2.bf16.msra.mxu0 0
      %691 = vmatprep.mubr.bf16.mxu0 0
      %692 = vmatmul.mubr.bf16.gmra.mxu0 %v654
      %v693 = vpop.f32.mrf.mxu0
      %v694 = vadd.f32 %v639, %v693
      %v695 = vpop.f32.mrf.mxu0
      %v696 = vpop.f32.mrf.mxu0
      %v697 = vadd.f32 %v639, %v696
      %v698 = vpop.f32.mrf.mxu0
      %699 = vmatprep.mubr.bf16.mxu0 0
      %700 = vmatmul.mubr.bf16.gmra.mxu0 %v657
      %v701 = vpop.f32.mrf.mxu0
      %v702 = vadd.f32 %v639, %v701
      %v703 = vpop.f32.mrf.mxu0
      %v704 = vpop.f32.mrf.mxu0
      %v705 = vadd.f32 %v639, %v704
      %v706 = vpop.f32.mrf.mxu0
      %707 = vdwg.mxu0
      %v708 = vadd.f32 %v485, %v694
      %v709 = vadd.f32 %v486, %v697
      %v710 = vadd.f32 %v487, %v702
      %v711 = vadd.f32 %v488, %v705
      %v712 = vmul.f32 %v708, %v468
      %v713 = vmul.f32 %v709, %v473
      %v714 = vmul.f32 %v710, %v478
      %v715 = vmul.f32 %v711, %v483
      %v716 = vpack.c.bf16 %v713, %v712
      %v717 = vpack.c.bf16 %v715, %v714
      %s718 = scalar_lea.vmem %s4, 8
      %v719 = vld [vmem:[%s718] sm:$0xf]
      %v720 = vld [vmem:[%s718 + $0x4] sm:$0xf]
      %v723 = vunpack.c.l.b16 %v719
      %v724 = vunpack.c.l.b16 %v720
      %v725 = vpack.c.b16 %v724, %v723
      %v728 = vsel %vm499, %v716, 0
      %v731 = vsel %vm499, %v717, 0
      %733 = vmatprep.subr.bf16.mxu0 0
      %734 = vmatpush1.bf16.msra.mxu0 0
      %735 = vmatprep.subr.bf16.mxu0 0
      %736 = vmatpush1.bf16.msra.mxu0 0
      %737 = vmatprep.subr.bf16.mxu0 0
      %738 = vmatpush1.bf16.msra.mxu0 0
      %739 = vmatprep.subr.bf16.mxu0 0
      %740 = vmatpush1.bf16.msra.mxu0 0
      %741 = vmatprep.subr.bf16.mxu0 0
      %742 = vmatpush1.bf16.msra.mxu0 0
      %743 = vmatprep.subr.bf16.mxu0 0
      %744 = vmatpush1.bf16.msra.mxu0 0
      %745 = vmatprep.subr.bf16.mxu0 0
      %746 = vmatpush1.bf16.msra.mxu0 0
      %747 = vmatprep.subr.bf16.mxu0 0
      %748 = vmatpush1.bf16.msra.mxu0 %v725
      %749 = vmatprep.subr.bf16.mxu0 0
      %750 = vmatpush2.bf16.msra.mxu0 0
      %751 = vmatprep.subr.bf16.mxu0 0
      %752 = vmatpush2.bf16.msra.mxu0 0
      %753 = vmatprep.subr.bf16.mxu0 0
      %754 = vmatpush2.bf16.msra.mxu0 0
      %755 = vmatprep.subr.bf16.mxu0 0
      %756 = vmatpush2.bf16.msra.mxu0 0
      %757 = vmatprep.subr.bf16.mxu0 0
      %758 = vmatpush2.bf16.msra.mxu0 0
      %759 = vmatprep.subr.bf16.mxu0 0
      %760 = vmatpush2.bf16.msra.mxu0 0
      %761 = vmatprep.subr.bf16.mxu0 0
      %762 = vmatpush2.bf16.msra.mxu0 0
      %763 = vmatprep.subr.bf16.mxu0 0
      %764 = vmatpush2.bf16.msra.mxu0 0
      %765 = vmatprep.mubr.bf16.mxu0 0
      %766 = vmatmul.mubr.bf16.gmra.mxu0 %v728
      %v767 = vpop.f32.mrf.mxu0
      %v768 = vadd.f32 0.0, %v767
      %v769 = vpop.f32.mrf.mxu0
      %v770 = vpop.f32.mrf.mxu0
      %v771 = vadd.f32 0.0, %v770
      %v772 = vpop.f32.mrf.mxu0
      %773 = vmatprep.mubr.bf16.mxu0 0
      %774 = vmatmul.mubr.bf16.gmra.mxu0 %v731
      %v775 = vpop.f32.mrf.mxu0
      %v776 = vadd.f32 0.0, %v775
      %v777 = vpop.f32.mrf.mxu0
      %v778 = vpop.f32.mrf.mxu0
      %v779 = vadd.f32 0.0, %v778
      %v780 = vpop.f32.mrf.mxu0
      %781 = vdwg.mxu0
      %vm786 = vcmask 1041408
      %v787 = vrot.slane %v768, 6
      %v788 = vrot.slane %v771, 6
      %v789 = vsel %vm786, %v787, %v788
      %v790 = vrot.slane %v776, 6
      %v791 = vsel %vm786, %v788, %v790
      %v792 = vrot.slane %v779, 6
      %v793 = vsel %vm786, %v790, %v792
      %v795 = vsel %vm786, 0.0, %v787
      %797 = vrot.lane.b32.xlu0 %v795, 16
      %v798 = vpop.permute.xlu0 %797
      %799 = vrot.lane.b32.xlu0 %v789, 16
      %v800 = vpop.permute.xlu0 %799
      %801 = vrot.lane.b32.xlu0 %v791, 16
      %v802 = vpop.permute.xlu0 %801
      %803 = vrot.lane.b32.xlu0 %v793, 16
      %v804 = vpop.permute.xlu0 %803
      %v809 = vadd.f32 %v768, %v798
      %v810 = vadd.f32 %v771, %v800
      %v811 = vadd.f32 %v776, %v802
      %v812 = vadd.f32 %v779, %v804
      %vm813 = vcmask 1045504
      %v814 = vrot.slane %v768, 2
      %v815 = vrot.slane %v771, 2
      %v816 = vsel %vm813, %v814, %v815
      %v817 = vrot.slane %v776, 2
      %v818 = vsel %vm813, %v815, %v817
      %v819 = vrot.slane %v779, 2
      %v820 = vsel %vm813, %v817, %v819
      %v822 = vsel %vm813, %v819, 0.0
      %824 = vrot.lane.b32.xlu0 %v816, 112
      %v825 = vpop.permute.xlu0 %824
      %826 = vrot.lane.b32.xlu0 %v818, 112
      %v827 = vpop.permute.xlu0 %826
      %828 = vrot.lane.b32.xlu0 %v820, 112
      %v829 = vpop.permute.xlu0 %828
      %830 = vrot.lane.b32.xlu0 %v822, 112
      %v831 = vpop.permute.xlu0 %830
      %v836 = vadd.f32 %v809, %v825
      %v837 = vadd.f32 %v810, %v827
      %v838 = vadd.f32 %v811, %v829
      %v839 = vadd.f32 %v812, %v831
      %s840 = scalar_lea.vmem %s5, 1
      %v841 = vld [vmem:[%s840] sm:$0x1]
      %v843 = vlaneseq
      %v844 = vshrl.u32 %v843, 7
      %v845 = vsub.s32 0, %v844
      %v846 = vrot.slane %v841, %v845
      %847 = vrot.lane.b32.xlu0 %v846, 16
      %v848 = vpop.permute.xlu0 %847
      %v850 = vadd.f32 %v836, %v848
      %v851 = vadd.f32 %v837, %v848
      %v852 = vadd.f32 %v838, %v848
      %v853 = vadd.f32 %v839, %v848
      %v854 = vmax.f32 %v850, 0.0
      %v855 = vmax.f32 %v851, 0.0
      %v856 = vmax.f32 %v852, 0.0
      %v857 = vmax.f32 %v853, 0.0
      %v858 = vpack.c.bf16 %v855, %v854
      %v859 = vpack.c.bf16 %v857, %v856
      %s860 = scalar_lea.vmem %s6, 8
      %v861 = vld [vmem:[%s860] sm:$0xf]
      %v862 = vld [vmem:[%s860 + $0x4] sm:$0xf]
      %s863 = scalar_lea.vmem %s7, 1
      %v864 = vld [vmem:[%s863] sm:$0x1]
      %v866 = vlaneseq
      %v867 = vshrl.u32 %v866, 7
      %v868 = vsub.s32 0, %v867
      %v869 = vrot.slane %v864, %v868
      %873 = vrot.lane.b32.xlu0 %v858, 112
      %v874 = vpop.permute.xlu0 %873
      %875 = vrot.lane.b32.xlu0 %v859, 112
      %v876 = vpop.permute.xlu0 %875
      %v879 = vunpack.c.l.b16 %v861
      %v880 = vunpack.c.l.b16 %v862
      %v881 = vpack.c.b16 %v880, %v879
      %v884 = vsel %vm499, %v874, 0
      %v887 = vsel %vm499, %v876, 0
      %889 = vmatprep.subr.bf16.mxu0 0
      %890 = vmatpush1.bf16.msra.mxu0 0
      %891 = vmatprep.subr.bf16.mxu0 0
      %892 = vmatpush1.bf16.msra.mxu0 0
      %893 = vmatprep.subr.bf16.mxu0 0
      %894 = vmatpush1.bf16.msra.mxu0 0
      %895 = vmatprep.subr.bf16.mxu0 0
      %896 = vmatpush1.bf16.msra.mxu0 0
      %897 = vmatprep.subr.bf16.mxu0 0
      %898 = vmatpush1.bf16.msra.mxu0 0
      %899 = vmatprep.subr.bf16.mxu0 0
      %900 = vmatpush1.bf16.msra.mxu0 0
      %901 = vmatprep.subr.bf16.mxu0 0
      %902 = vmatpush1.bf16.msra.mxu0 0
      %903 = vmatprep.subr.bf16.mxu0 0
      %904 = vmatpush1.bf16.msra.mxu0 %v881
      %905 = vmatprep.subr.bf16.mxu0 0
      %906 = vmatpush2.bf16.msra.mxu0 0
      %907 = vmatprep.subr.bf16.mxu0 0
      %908 = vmatpush2.bf16.msra.mxu0 0
      %909 = vmatprep.subr.bf16.mxu0 0
      %910 = vmatpush2.bf16.msra.mxu0 0
      %911 = vmatprep.subr.bf16.mxu0 0
      %912 = vmatpush2.bf16.msra.mxu0 0
      %913 = vmatprep.subr.bf16.mxu0 0
      %914 = vmatpush2.bf16.msra.mxu0 0
      %915 = vmatprep.subr.bf16.mxu0 0
      %916 = vmatpush2.bf16.msra.mxu0 0
      %917 = vmatprep.subr.bf16.mxu0 0
      %918 = vmatpush2.bf16.msra.mxu0 0
      %919 = vmatprep.subr.bf16.mxu0 0
      %920 = vmatpush2.bf16.msra.mxu0 0
      %921 = vmatprep.mubr.bf16.mxu0 0
      %922 = vmatmul.mubr.bf16.gmra.mxu0 %v884
      %v923 = vpop.f32.mrf.mxu0
      %v924 = vadd.f32 %v869, %v923
      %v925 = vpop.f32.mrf.mxu0
      %v926 = vpop.f32.mrf.mxu0
      %v927 = vadd.f32 %v869, %v926
      %v928 = vpop.f32.mrf.mxu0
      %929 = vmatprep.mubr.bf16.mxu0 0
      %930 = vmatmul.mubr.bf16.gmra.mxu0 %v887
      %v931 = vpop.f32.mrf.mxu0
      %v932 = vadd.f32 %v869, %v931
      %v933 = vpop.f32.mrf.mxu0
      %v934 = vpop.f32.mrf.mxu0
      %v935 = vadd.f32 %v869, %v934
      %v936 = vpop.f32.mrf.mxu0
      %937 = vdwg.mxu0
      %v938 = vadd.f32 %v712, %v924
      %v939 = vadd.f32 %v713, %v927
      %v940 = vadd.f32 %v714, %v932
      %v941 = vadd.f32 %v715, %v935
      %v942 = vmul.f32 %v938, %v468
      %v943 = vmul.f32 %v939, %v473
      %v944 = vmul.f32 %v940, %v478
      %v945 = vmul.f32 %v941, %v483
      %v946 = vpack.c.bf16 %v943, %v942
      %v947 = vpack.c.bf16 %v945, %v944
      %s948 = scalar_lea.vmem %s4, 16
      %v949 = vld [vmem:[%s948] sm:$0xf]
      %v950 = vld [vmem:[%s948 + $0x4] sm:$0xf]
      %v953 = vunpack.c.l.b16 %v949
      %v954 = vunpack.c.l.b16 %v950
      %v955 = vpack.c.b16 %v954, %v953
      %v958 = vsel %vm499, %v946, 0
      %v961 = vsel %vm499, %v947, 0
      %963 = vmatprep.subr.bf16.mxu0 0
      %964 = vmatpush1.bf16.msra.mxu0 0
      %965 = vmatprep.subr.bf16.mxu0 0
      %966 = vmatpush1.bf16.msra.mxu0 0
      %967 = vmatprep.subr.bf16.mxu0 0
      %968 = vmatpush1.bf16.msra.mxu0 0
      %969 = vmatprep.subr.bf16.mxu0 0
      %970 = vmatpush1.bf16.msra.mxu0 0
      %971 = vmatprep.subr.bf16.mxu0 0
      %972 = vmatpush1.bf16.msra.mxu0 0
      %973 = vmatprep.subr.bf16.mxu0 0
      %974 = vmatpush1.bf16.msra.mxu0 0
      %975 = vmatprep.subr.bf16.mxu0 0
      %976 = vmatpush1.bf16.msra.mxu0 0
      %977 = vmatprep.subr.bf16.mxu0 0
      %978 = vmatpush1.bf16.msra.mxu0 %v955
      %979 = vmatprep.subr.bf16.mxu0 0
      %980 = vmatpush2.bf16.msra.mxu0 0
      %981 = vmatprep.subr.bf16.mxu0 0
      %982 = vmatpush2.bf16.msra.mxu0 0
      %983 = vmatprep.subr.bf16.mxu0 0
      %984 = vmatpush2.bf16.msra.mxu0 0
      %985 = vmatprep.subr.bf16.mxu0 0
      %986 = vmatpush2.bf16.msra.mxu0 0
      %987 = vmatprep.subr.bf16.mxu0 0
      %988 = vmatpush2.bf16.msra.mxu0 0
      %989 = vmatprep.subr.bf16.mxu0 0
      %990 = vmatpush2.bf16.msra.mxu0 0
      %991 = vmatprep.subr.bf16.mxu0 0
      %992 = vmatpush2.bf16.msra.mxu0 0
      %993 = vmatprep.subr.bf16.mxu0 0
      %994 = vmatpush2.bf16.msra.mxu0 0
      %995 = vmatprep.mubr.bf16.mxu0 0
      %996 = vmatmul.mubr.bf16.gmra.mxu0 %v958
      %v997 = vpop.f32.mrf.mxu0
      %v998 = vadd.f32 0.0, %v997
      %v999 = vpop.f32.mrf.mxu0
      %v1000 = vpop.f32.mrf.mxu0
      %v1001 = vadd.f32 0.0, %v1000
      %v1002 = vpop.f32.mrf.mxu0
      %1003 = vmatprep.mubr.bf16.mxu0 0
      %1004 = vmatmul.mubr.bf16.gmra.mxu0 %v961
      %v1005 = vpop.f32.mrf.mxu0
      %v1006 = vadd.f32 0.0, %v1005
      %v1007 = vpop.f32.mrf.mxu0
      %v1008 = vpop.f32.mrf.mxu0
      %v1009 = vadd.f32 0.0, %v1008
      %v1010 = vpop.f32.mrf.mxu0
      %1011 = vdwg.mxu0
      %vm1016 = vcmask 1043456
      %v1017 = vrot.slane %v998, 4
      %v1018 = vrot.slane %v1001, 4
      %v1019 = vsel %vm1016, %v1017, %v1018
      %v1020 = vrot.slane %v1006, 4
      %v1021 = vsel %vm1016, %v1018, %v1020
      %v1022 = vrot.slane %v1009, 4
      %v1023 = vsel %vm1016, %v1020, %v1022
      %v1025 = vsel %vm1016, 0.0, %v1017
      %1027 = vrot.lane.b32.xlu0 %v1025, 16
      %v1028 = vpop.permute.xlu0 %1027
      %1029 = vrot.lane.b32.xlu0 %v1019, 16
      %v1030 = vpop.permute.xlu0 %1029
      %1031 = vrot.lane.b32.xlu0 %v1021, 16
      %v1032 = vpop.permute.xlu0 %1031
      %1033 = vrot.lane.b32.xlu0 %v1023, 16
      %v1034 = vpop.permute.xlu0 %1033
      %v1039 = vadd.f32 %v998, %v1028
      %v1040 = vadd.f32 %v1001, %v1030
      %v1041 = vadd.f32 %v1006, %v1032
      %v1042 = vadd.f32 %v1009, %v1034
      %v1044 = vsel %vm1016, %v1022, 0.0
      %1046 = vrot.lane.b32.xlu0 %v1019, 112
      %v1047 = vpop.permute.xlu0 %1046
      %1048 = vrot.lane.b32.xlu0 %v1021, 112
      %v1049 = vpop.permute.xlu0 %1048
      %1050 = vrot.lane.b32.xlu0 %v1023, 112
      %v1051 = vpop.permute.xlu0 %1050
      %1052 = vrot.lane.b32.xlu0 %v1044, 112
      %v1053 = vpop.permute.xlu0 %1052
      %v1058 = vadd.f32 %v1039, %v1047
      %v1059 = vadd.f32 %v1040, %v1049
      %v1060 = vadd.f32 %v1041, %v1051
      %v1061 = vadd.f32 %v1042, %v1053
      %s1062 = scalar_lea.vmem %s5, 2
      %v1063 = vld [vmem:[%s1062] sm:$0x1]
      %v1065 = vlaneseq
      %v1066 = vshrl.u32 %v1065, 7
      %v1067 = vsub.s32 0, %v1066
      %v1068 = vrot.slane %v1063, %v1067
      %1069 = vrot.lane.b32.xlu0 %v1068, 16
      %v1070 = vpop.permute.xlu0 %1069
      %v1072 = vadd.f32 %v1058, %v1070
      %v1073 = vadd.f32 %v1059, %v1070
      %v1074 = vadd.f32 %v1060, %v1070
      %v1075 = vadd.f32 %v1061, %v1070
      %v1076 = vmax.f32 %v1072, 0.0
      %v1077 = vmax.f32 %v1073, 0.0
      %v1078 = vmax.f32 %v1074, 0.0
      %v1079 = vmax.f32 %v1075, 0.0
      %v1080 = vpack.c.bf16 %v1077, %v1076
      %v1081 = vpack.c.bf16 %v1079, %v1078
      %s1082 = scalar_lea.vmem %s6, 16
      %v1083 = vld [vmem:[%s1082] sm:$0xf]
      %v1084 = vld [vmem:[%s1082 + $0x4] sm:$0xf]
      %s1085 = scalar_lea.vmem %s7, 2
      %v1086 = vld [vmem:[%s1085] sm:$0x1]
      %v1088 = vlaneseq
      %v1089 = vshrl.u32 %v1088, 7
      %v1090 = vsub.s32 0, %v1089
      %v1091 = vrot.slane %v1086, %v1090
      %1095 = vrot.lane.b32.xlu0 %v1080, 112
      %v1096 = vpop.permute.xlu0 %1095
      %1097 = vrot.lane.b32.xlu0 %v1081, 112
      %v1098 = vpop.permute.xlu0 %1097
      %v1101 = vunpack.c.l.b16 %v1083
      %v1102 = vunpack.c.l.b16 %v1084
      %v1103 = vpack.c.b16 %v1102, %v1101
      %v1106 = vsel %vm499, %v1096, 0
      %v1109 = vsel %vm499, %v1098, 0
      %1111 = vmatprep.subr.bf16.mxu0 0
      %1112 = vmatpush1.bf16.msra.mxu0 0
      %1113 = vmatprep.subr.bf16.mxu0 0
      %1114 = vmatpush1.bf16.msra.mxu0 0
      %1115 = vmatprep.subr.bf16.mxu0 0
      %1116 = vmatpush1.bf16.msra.mxu0 0
      %1117 = vmatprep.subr.bf16.mxu0 0
      %1118 = vmatpush1.bf16.msra.mxu0 0
      %1119 = vmatprep.subr.bf16.mxu0 0
      %1120 = vmatpush1.bf16.msra.mxu0 0
      %1121 = vmatprep.subr.bf16.mxu0 0
      %1122 = vmatpush1.bf16.msra.mxu0 0
      %1123 = vmatprep.subr.bf16.mxu0 0
      %1124 = vmatpush1.bf16.msra.mxu0 0
      %1125 = vmatprep.subr.bf16.mxu0 0
      %1126 = vmatpush1.bf16.msra.mxu0 %v1103
      %1127 = vmatprep.subr.bf16.mxu0 0
      %1128 = vmatpush2.bf16.msra.mxu0 0
      %1129 = vmatprep.subr.bf16.mxu0 0
      %1130 = vmatpush2.bf16.msra.mxu0 0
      %1131 = vmatprep.subr.bf16.mxu0 0
      %1132 = vmatpush2.bf16.msra.mxu0 0
      %1133 = vmatprep.subr.bf16.mxu0 0
      %1134 = vmatpush2.bf16.msra.mxu0 0
      %1135 = vmatprep.subr.bf16.mxu0 0
      %1136 = vmatpush2.bf16.msra.mxu0 0
      %1137 = vmatprep.subr.bf16.mxu0 0
      %1138 = vmatpush2.bf16.msra.mxu0 0
      %1139 = vmatprep.subr.bf16.mxu0 0
      %1140 = vmatpush2.bf16.msra.mxu0 0
      %1141 = vmatprep.subr.bf16.mxu0 0
      %1142 = vmatpush2.bf16.msra.mxu0 0
      %1143 = vmatprep.mubr.bf16.mxu0 0
      %1144 = vmatmul.mubr.bf16.gmra.mxu0 %v1106
      %v1145 = vpop.f32.mrf.mxu0
      %v1146 = vadd.f32 %v1091, %v1145
      %v1147 = vpop.f32.mrf.mxu0
      %v1148 = vpop.f32.mrf.mxu0
      %v1149 = vadd.f32 %v1091, %v1148
      %v1150 = vpop.f32.mrf.mxu0
      %1151 = vmatprep.mubr.bf16.mxu0 0
      %1152 = vmatmul.mubr.bf16.gmra.mxu0 %v1109
      %v1153 = vpop.f32.mrf.mxu0
      %v1154 = vadd.f32 %v1091, %v1153
      %v1155 = vpop.f32.mrf.mxu0
      %v1156 = vpop.f32.mrf.mxu0
      %v1157 = vadd.f32 %v1091, %v1156
      %v1158 = vpop.f32.mrf.mxu0
      %1159 = vdwg.mxu0
      %v1160 = vadd.f32 %v942, %v1146
      %v1161 = vadd.f32 %v943, %v1149
      %v1162 = vadd.f32 %v944, %v1154
      %v1163 = vadd.f32 %v945, %v1157
      %v1164 = vmul.f32 %v1160, %v468
      %v1165 = vmul.f32 %v1161, %v473
      %v1166 = vmul.f32 %v1162, %v478
      %v1167 = vmul.f32 %v1163, %v483
      %v1168 = vpack.c.bf16 %v1165, %v1164
      %v1169 = vpack.c.bf16 %v1167, %v1166
      %v1170 = vld [vmem:[%s8] sm:$0xf]
      %v1171 = vld [vmem:[%s8 + $0x4] sm:$0xf]
      %v1172 = vld [vmem:[%s9] sm:$0x1]
      %v1174 = vlaneseq
      %v1175 = vshrl.u32 %v1174, 7
      %v1176 = vsub.s32 0, %v1175
      %v1177 = vrot.slane %v1172, %v1176
      %v1181 = vunpack.c.l.b16 %v1170
      %v1182 = vunpack.c.l.b16 %v1171
      %v1183 = vpack.c.b16 %v1182, %v1181
      %v1186 = vsel %vm499, %v1168, 0
      %v1189 = vsel %vm499, %v1169, 0
      %1191 = vmatprep.subr.bf16.mxu0 0
      %1192 = vmatpush1.bf16.msra.mxu0 0
      %1193 = vmatprep.subr.bf16.mxu0 0
      %1194 = vmatpush1.bf16.msra.mxu0 0
      %1195 = vmatprep.subr.bf16.mxu0 0
      %1196 = vmatpush1.bf16.msra.mxu0 0
      %1197 = vmatprep.subr.bf16.mxu0 0
      %1198 = vmatpush1.bf16.msra.mxu0 0
      %1199 = vmatprep.subr.bf16.mxu0 0
      %1200 = vmatpush1.bf16.msra.mxu0 0
      %1201 = vmatprep.subr.bf16.mxu0 0
      %1202 = vmatpush1.bf16.msra.mxu0 0
      %1203 = vmatprep.subr.bf16.mxu0 0
      %1204 = vmatpush1.bf16.msra.mxu0 0
      %1205 = vmatprep.subr.bf16.mxu0 0
      %1206 = vmatpush1.bf16.msra.mxu0 %v1183
      %1207 = vmatprep.subr.bf16.mxu0 0
      %1208 = vmatpush2.bf16.msra.mxu0 0
      %1209 = vmatprep.subr.bf16.mxu0 0
      %1210 = vmatpush2.bf16.msra.mxu0 0
      %1211 = vmatprep.subr.bf16.mxu0 0
      %1212 = vmatpush2.bf16.msra.mxu0 0
      %1213 = vmatprep.subr.bf16.mxu0 0
      %1214 = vmatpush2.bf16.msra.mxu0 0
      %1215 = vmatprep.subr.bf16.mxu0 0
      %1216 = vmatpush2.bf16.msra.mxu0 0
      %1217 = vmatprep.subr.bf16.mxu0 0
      %1218 = vmatpush2.bf16.msra.mxu0 0
      %1219 = vmatprep.subr.bf16.mxu0 0
      %1220 = vmatpush2.bf16.msra.mxu0 0
      %1221 = vmatprep.subr.bf16.mxu0 0
      %1222 = vmatpush2.bf16.msra.mxu0 0
      %1223 = vmatprep.mubr.bf16.mxu0 0
      %1224 = vmatmul.mubr.bf16.gmra.mxu0 %v1186
      %v1225 = vpop.f32.mrf.mxu0
      %v1226 = vadd.f32 %v1177, %v1225
      %v1227 = vpop.f32.mrf.mxu0
      %v1228 = vpop.f32.mrf.mxu0
      %v1229 = vadd.f32 %v1177, %v1228
      %v1230 = vpop.f32.mrf.mxu0
      %1231 = vmatprep.mubr.bf16.mxu0 0
      %1232 = vmatmul.mubr.bf16.gmra.mxu0 %v1189
      %v1233 = vpop.f32.mrf.mxu0
      %v1234 = vadd.f32 %v1177, %v1233
      %v1235 = vpop.f32.mrf.mxu0
      %v1236 = vpop.f32.mrf.mxu0
      %v1237 = vadd.f32 %v1177, %v1236
      %v1238 = vpop.f32.mrf.mxu0
      %1239 = vdwg.mxu0
      %v1240 = vmul.f32 %v1226, %v468
      %v1241 = vmul.f32 %v1229, %v473
      %v1242 = vmul.f32 %v1234, %v478
      %v1243 = vmul.f32 %v1237, %v483
      %1244 = vst.msk [vmem:[%s379] sm:$0xff] %vm405, %v1240
      %1245 = vst.msk [vmem:[%s379 + $0x8] sm:$0xff] %vm405, %v1241
      %1246 = vst.msk [vmem:[%s379 + $0x10] sm:$0xff] %vm405, %v1242
      %1247 = vst.msk [vmem:[%s379 + $0x18] sm:$0xff] %vm405, %v1243
      %p1248 = scmp.lt.s32.totalorder %s21, 1
      %s1249 = scalar_select %p1248, %s21, 1
      %s1250 = smul.addr %s1249, 4
      %s1251 = smul.addr %s1250, 8
      %s1252 = scalar_lea.vmem %s10, %s1251
      // Predicated region
      $region61: #{_lambda_.3} parent=59 // pred_check
        %p1253 = pneg %p259
      $region62: #{_lambda_.3} parent=59 // pred_check_branch
        %1255 = sbr.rel (%p1253) target = $region64
      $region63: #{_lambda_.3} parent=59 // pred_region
        _
      $region64: #{_lambda_.3} parent=59 // pred_fallthru
        _
    $region60: #{_lambda_.3} parent=5 // pred_fallthru
      _
    %p1256 = scmp.le.s32.totalorder 2, %s16
    // Predicated region
    $region65: #{_lambda_.3} parent=5 // pred_check
      %p1257 = pneg %p1256
    $region66: #{_lambda_.3} parent=5 // pred_check_branch
      %1259 = sbr.rel (%p1257) target = $region68
    $region67: #{_lambda_.3} parent=5 // pred_region
      %s1260 = ssub.s32 %s16, 2
      // Predicated region
      $region69: #{_lambda_.3} parent=67 // pred_check
        %p1261 = pneg %p265
      $region70: #{_lambda_.3} parent=67 // pred_check_branch
        %1263 = sbr.rel (%p1261) target = $region72
      $region71: #{_lambda_.3} parent=67 // pred_region
        %p1264 = scmp.lt.s32.totalorder %s22, 1
        %s1265 = scalar_select %p1264, %s22, 1
        %s1266 = smul.addr %s1265, 4
        %s1267 = smul.addr %s1266, 8
        %s1268 = scalar_lea.vmem %s10, %s1267
      $region72: #{_lambda_.3} parent=67 // pred_fallthru
        _
    $region68: #{_lambda_.3} parent=5 // pred_fallthru
      _
  $region6: #{_lambda_.3} parent=0 // loop_footer
    %s20 = sadd.s32 1, %s16
  $region7: #{_lambda_.3} parent=0 // loop_footer_branch
    %15 = sbr.rel target = $region3
  $region8: #{_lambda_.3} parent=0 // loop_exit
    _

</llo_original>
